<compile_context>
chip_gen: v6e
topology: v6e:2x2x1
jax: 0.10.0
libtpu: 0.0.40
codegen_flags: <defaults>
</compile_context>

<pallas_src>
import jax
import jax.numpy as jnp
from jax import lax
from jax.experimental import pallas as pl
from jax.experimental.pallas import tpu as pltpu


def _vmem():
    # Small problem sizes -> every operand fully resident in VMEM, no grid.
    return pl.BlockSpec(memory_space=pltpu.MemorySpace.VMEM)


# ---------------------------------------------------------------------------
# One fused Pallas kernel for the whole forward pass (minus nonzero).
# ---------------------------------------------------------------------------
def fused_gcn_kernel(edge_ref, eli_ref, x_ref, w1_ref, b1_ref, w2_ref, b2_ref,
                     h_ref, z_ref, padj_ref, mul_ref, sum_ref):
    n = x_ref.shape[0]
    e = edge_ref.shape[1]
    e2 = eli_ref.shape[0]          # 2 * E_LBL (src rows then dst rows)
    e_lbl = e2 // 2
    f32 = jnp.float32

    # ---- gcn_norm, fused: A_hat = D^-1/2 (A + I) D^-1/2 --------------------
    # One-hot matmul == scatter-add a.at[col, row].add(1):
    #   OC[i, e] = (col[e] == i), OR[j, e] = (row[e] == j),  A = OC @ OR^T
    node_iota = lax.broadcasted_iota(jnp.int32, (n, e), 0)
    row = edge_ref[0:1, :]                        # (1, E) source nodes
    col = edge_ref[1:2, :]                        # (1, E) target nodes
    oc = (node_iota == col).astype(f32)           # (N, E)
    orr = (node_iota == row).astype(f32)          # (N, E)
    a = lax.dot_general(oc, orr, (((1,), (1,)), ((), ())),
                        preferred_element_type=f32)             # (N, N)
    eye = (lax.broadcasted_iota(jnp.int32, (n, n), 0)
           == lax.broadcasted_iota(jnp.int32, (n, n), 1)).astype(f32)
    a = a + eye

    # Row-sums laid out both as a column and as a row via two tiny MXU
    # contractions (avoids an explicit XLU transpose of the (N, 1) vector).
    ones_col = jnp.ones((n, 1), f32)
    ones_row = jnp.ones((1, n), f32)
    deg_col = jnp.dot(a, ones_col, preferred_element_type=f32)              # (N, 1)
    deg_row = lax.dot_general(ones_row, a, (((1,), (1,)), ((), ())),
                              preferred_element_type=f32)                   # (1, N)
    dinv_col = jnp.where(deg_col > 0.0, lax.rsqrt(deg_col), 0.0)
    dinv_row = jnp.where(deg_row > 0.0, lax.rsqrt(deg_row), 0.0)
    a_hat = dinv_col * a * dinv_row

    # ---- conv1: relu(A_hat @ (X @ W1) + b1) ---------------------------------
    xw1 = jnp.dot(x_ref[...], w1_ref[...], preferred_element_type=f32)
    h = jnp.dot(a_hat, xw1, preferred_element_type=f32) + b1_ref[...]
    h = jnp.maximum(h, 0.0)
    h_ref[...] = h

    # ---- conv2: A_hat @ (H @ W2) + b2 ---------------------------------------
    hw2 = jnp.dot(h, w2_ref[...], preferred_element_type=f32)
    z = jnp.dot(a_hat, hw2, preferred_element_type=f32) + b2_ref[...]
    z_ref[...] = z

    # ---- decode_all: prob_adj = z @ z.T (contract feature dim of both
    # operands; no explicit transpose materialized) ---------------------------
    padj_ref[...] = lax.dot_general(z, z, (((1,), (1,)), ((), ())),
                                    preferred_element_type=f32)

    # ---- decode: single merged one-hot gather for src & dst, built in-kernel
    sel = (lax.broadcasted_iota(jnp.int32, (e2, n), 1)
           == eli_ref[...]).astype(f32)                          # (2*E_LBL, N)
    zsel = jnp.dot(sel, z, preferred_element_type=f32)           # (2*E_LBL, F)
    m = zsel[:e_lbl, :] * zsel[e_lbl:, :]
    mul_ref[...] = m
    # decode_sum produced lane-dense as a (1, E_LBL) row on the MXU.
    ones_f = jnp.ones((1, m.shape[1]), f32)
    sum_ref[...] = lax.dot_general(ones_f, m, (((1,), (1,)), ((), ())),
                                   preferred_element_type=f32)


def fused_forward(edge_index, edge_label_index, x, w1, b1, w2, b2):
    n, in_c = x.shape
    hid = w1.shape[1]
    out_c = w2.shape[1]
    e = edge_index.shape[1]
    e_lbl = edge_label_index.shape[1]
    e2 = 2 * e_lbl
    # Row-major flatten -> first E_LBL rows are src indices, next E_LBL are dst.
    eli_col = edge_label_index.reshape(e2, 1).astype(jnp.int32)

    flops = 2 * (n * n * e                       # adjacency one-hot matmul
                 + 2 * n * n                     # degree contractions
                 + n * in_c * hid + n * n * hid  # conv1
                 + n * hid * out_c + n * n * out_c  # conv2
                 + n * n * out_c                 # prob_adj
                 + e2 * n * out_c                # gather
                 + e_lbl * out_c)                # decode_sum
    bytes_accessed = 4 * (2 * e + e2 + n * in_c + in_c * hid + hid
                          + hid * out_c + out_c
                          + n * hid + n * out_c + n * n
                          + e_lbl * out_c + e_lbl)

    return pl.pallas_call(
        fused_gcn_kernel,
        out_shape=(
            jax.ShapeDtypeStruct((n, hid), jnp.float32),        # conv1 (h)
            jax.ShapeDtypeStruct((n, out_c), jnp.float32),      # conv2 (z)
            jax.ShapeDtypeStruct((n, n), jnp.float32),          # prob_adj
            jax.ShapeDtypeStruct((e_lbl, out_c), jnp.float32),  # decode_mul
            jax.ShapeDtypeStruct((1, e_lbl), jnp.float32),      # decode_sum
        ),
        in_specs=[_vmem()] * 7,
        out_specs=(_vmem(),) * 5,
        cost_estimate=pl.CostEstimate(flops=flops, transcendentals=2 * n,
                                      bytes_accessed=bytes_accessed),
    )(edge_index.astype(jnp.int32), eli_col, x,
      w1, b1.reshape(1, -1), w2, b2.reshape(1, -1))


# ---------------------------------------------------------------------------
# Thin JAX glue (the only remaining wrapper op is a tiny reshape of indices).
# ---------------------------------------------------------------------------
@jax.jit
def _net_core(x, edge_index, edge_label_index, params):
    h, z, prob_adj, mul, s = fused_forward(
        edge_index, edge_label_index, x,
        params["w1"], params["b1"], params["w2"], params["b2"])
    return h, z, prob_adj, mul, s[0]


def net_forward(x, edge_index, edge_label_index, params):
    h, z, prob_adj, mul, s = _net_core(x, edge_index, edge_label_index, params)
    outputs = {
        "conv1": h,
        "conv2": z,
        "decode_mul": mul,
        "decode_sum": s,
        "prob_adj": prob_adj,
    }
    # TODO(synk): dynamic-shaped nonzero has no Pallas/jit equivalent; computed
    # eagerly (forces the one device->host sync of the forward pass).
    idx = jnp.nonzero(prob_adj > 0)
    outputs["decode_all_final"] = jnp.stack(idx, axis=0).astype(jnp.int32)
    return outputs


# ---------------------------------------------------------------------------
# Pure-JAX reference pieces (used only for the numerical sanity check).
# ---------------------------------------------------------------------------
def gcn_norm_dense(edge_index, num_nodes):
    # PyG gcn_norm semantics (flow='source_to_target'): add self loops,
    # A_hat[i, j] = deg^-1/2[i] * (count of edges j->i + I[i,j]) * deg^-1/2[j].
    # NOTE: duplicate edges are counted multiply (same as the kernel).
    row, col = edge_index[0], edge_index[1]
    a = jnp.zeros((num_nodes, num_nodes), jnp.float32)
    a = a.at[col, row].add(1.0)
    a = a + jnp.eye(num_nodes, dtype=jnp.float32)
    deg = a.sum(axis=1)
    dinv = jnp.where(deg > 0, 1.0 / jnp.sqrt(deg), 0.0)
    return dinv[:, None] * a * dinv[None, :]


# ---------------------------------------------------------------------------
# Driver
# ---------------------------------------------------------------------------
if __name__ == "__main__":
    N = 128           # nodes
    IN_C = 128        # in_channels (matches the spec's 128-dim features)
    HID_C = 128       # hidden_channels (lane-dense)
    OUT_C = 64        # out_channels
    E = 512           # message-passing edges
    E_LBL = 32        # edge_label pairs

    key = jax.random.PRNGKey(0)
    kx, ke, kl, kw1, kw2, kb1, kb2 = jax.random.split(key, 7)

    x = jax.random.normal(kx, (N, IN_C), dtype=jnp.float32)
    edge_index = jax.random.randint(ke, (2, E), 0, N, dtype=jnp.int32)
    edge_label_index = jax.random.randint(kl, (2, E_LBL), 0, N, dtype=jnp.int32)

    # Deterministic glorot-ish parameter init (GCNConv: weight (in,out), bias (out,)).
    params = {
        "w1": jax.random.normal(kw1, (IN_C, HID_C), jnp.float32) * (1.0 / jnp.sqrt(IN_C)),
        "b1": jax.random.normal(kb1, (HID_C,), jnp.float32) * 0.01,
        "w2": jax.random.normal(kw2, (HID_C, OUT_C), jnp.float32) * (1.0 / jnp.sqrt(HID_C)),
        "b2": jax.random.normal(kb2, (OUT_C,), jnp.float32) * 0.01,
    }

    outs = net_forward(x, edge_index, edge_label_index, params)
    for v in outs.values():
        jax.block_until_ready(v)

    assert outs["conv1"].shape == (N, HID_C)
    assert outs["conv2"].shape == (N, OUT_C)
    assert outs["decode_mul"].shape == (E_LBL, OUT_C)
    assert outs["decode_sum"].shape == (E_LBL,)
    assert outs["prob_adj"].shape == (N, N)
    assert outs["decode_all_final"].shape[0] == 2

    # Numerical sanity check vs. pure-JAX reference (f32, HIGHEST precision).
    hi = jax.lax.Precision.HIGHEST
    a_hat_ref = gcn_norm_dense(edge_index, N)
    h_ref = jnp.maximum(
        jnp.dot(a_hat_ref, jnp.dot(x, params["w1"], precision=hi), precision=hi)
        + params["b1"], 0.0)
    z_ref = jnp.dot(a_hat_ref, jnp.dot(h_ref, params["w2"], precision=hi),
                    precision=hi) + params["b2"]
    # Tolerances allow for MXU f32-emulation rounding differences.
    assert jnp.allclose(outs["conv1"], h_ref, atol=1e-2, rtol=1e-2), \
        float(jnp.max(jnp.abs(outs["conv1"] - h_ref)))
    assert jnp.allclose(outs["conv2"], z_ref, atol=1e-2, rtol=1e-2), \
        float(jnp.max(jnp.abs(outs["conv2"] - z_ref)))
    s_ref = (z_ref[edge_label_index[0]] * z_ref[edge_label_index[1]]).sum(-1)
    assert jnp.allclose(outs["decode_sum"], s_ref, atol=1e-2, rtol=1e-2), \
        float(jnp.max(jnp.abs(outs["decode_sum"] - s_ref)))
    padj_ref = jnp.dot(z_ref, z_ref.T, precision=hi)
    assert jnp.allclose(outs["prob_adj"], padj_ref, atol=1e-2, rtol=1e-2), \
        float(jnp.max(jnp.abs(outs["prob_adj"] - padj_ref)))

    print("KERNEL_OK")
</pallas_src>

<mosaic_0001>
module attributes {stable_mosaic.version = 11 : i64} {
  func.func @fused_gcn_kernel(%arg0: memref<2x512xi32, #tpu.memory_space<vmem>>, %arg1: memref<64x1xi32, #tpu.memory_space<vmem>>, %arg2: memref<128x128xf32, #tpu.memory_space<vmem>>, %arg3: memref<128x128xf32, #tpu.memory_space<vmem>>, %arg4: memref<1x128xf32, #tpu.memory_space<vmem>>, %arg5: memref<128x64xf32, #tpu.memory_space<vmem>>, %arg6: memref<1x64xf32, #tpu.memory_space<vmem>>, %arg7: memref<128x128xf32, #tpu.memory_space<vmem>>, %arg8: memref<128x64xf32, #tpu.memory_space<vmem>>, %arg9: memref<128x128xf32, #tpu.memory_space<vmem>>, %arg10: memref<32x64xf32, #tpu.memory_space<vmem>>, %arg11: memref<1x32xf32, #tpu.memory_space<vmem>>) attributes {dimension_semantics = [], scalar_prefetch = 0 : i64, scratch_operands = 0 : i64, tpu.core_type = #tpu.core_type<tc>} {
    %0 = tpu.iota {dimensions = array<i32: 0>} : vector<128x512xi32>
    %c0 = arith.constant 0 : index
    %c0_0 = arith.constant 0 : index
    %1 = vector.load %arg0[%c0, %c0_0] : memref<2x512xi32, #tpu.memory_space<vmem>>, vector<1x512xi32>
    %c1 = arith.constant 1 : index
    %c0_1 = arith.constant 0 : index
    %2 = vector.load %arg0[%c1, %c0_1] : memref<2x512xi32, #tpu.memory_space<vmem>>, vector<1x512xi32>
    %3 = vector.broadcast %2 : vector<1x512xi32> to vector<128x512xi32>
    %4 = arith.cmpi eq, %0, %3 : vector<128x512xi32>
    %5 = arith.extui %4 : vector<128x512xi1> to vector<128x512xi32>
    %6 = arith.sitofp %5 : vector<128x512xi32> to vector<128x512xf32>
    %7 = vector.broadcast %1 : vector<1x512xi32> to vector<128x512xi32>
    %8 = arith.cmpi eq, %0, %7 : vector<128x512xi32>
    %9 = arith.extui %8 : vector<128x512xi1> to vector<128x512xi32>
    %10 = arith.sitofp %9 : vector<128x512xi32> to vector<128x512xf32>
    %cst = arith.constant dense<0.000000e+00> : vector<128x128xf32>
    %11 = tpu.matmul %6, %10, %cst {dimension_numbers = #tpu.dot_dimension_numbers<[1], [1], [0], [0], [0, 0, 1, 0], [], []>} : vector<128x512xf32>, vector<128x512xf32>, vector<128x128xf32> -> vector<128x128xf32>
    %12 = tpu.iota {dimensions = array<i32: 0>} : vector<128x128xi32>
    %13 = tpu.iota {dimensions = array<i32: 1>} : vector<128x128xi32>
    %14 = arith.cmpi eq, %12, %13 : vector<128x128xi32>
    %15 = arith.extui %14 : vector<128x128xi1> to vector<128x128xi32>
    %16 = arith.sitofp %15 : vector<128x128xi32> to vector<128x128xf32>
    %17 = arith.addf %11, %16 : vector<128x128xf32>
    %cst_2 = arith.constant 1.000000e+00 : f32
    %18 = vector.broadcast %cst_2 : f32 to vector<128x1xf32>
    %cst_3 = arith.constant 1.000000e+00 : f32
    %19 = vector.broadcast %cst_3 : f32 to vector<1x128xf32>
    %cst_4 = arith.constant dense<0.000000e+00> : vector<128x1xf32>
    %20 = tpu.matmul %17, %18, %cst_4 {dimension_numbers = #tpu.dot_dimension_numbers<[1], [0], [0], [1], [0, 0, 1, 1], [], []>} : vector<128x128xf32>, vector<128x1xf32>, vector<128x1xf32> -> vector<128x1xf32>
    %cst_5 = arith.constant dense<0.000000e+00> : vector<1x128xf32>
    %21 = tpu.matmul %19, %17, %cst_5 {dimension_numbers = #tpu.dot_dimension_numbers<[1], [1], [0], [0], [0, 0, 1, 0], [], []>} : vector<1x128xf32>, vector<128x128xf32>, vector<1x128xf32> -> vector<1x128xf32>
    %cst_6 = arith.constant 0.000000e+00 : f32
    %22 = vector.broadcast %cst_6 : f32 to vector<128x1xf32>
    %23 = arith.cmpf ogt, %20, %22 : vector<128x1xf32>
    %24 = math.rsqrt %20 : vector<128x1xf32>
    %cst_7 = arith.constant 0.000000e+00 : f32
    %25 = vector.broadcast %cst_7 : f32 to vector<128x1xf32>
    %26 = arith.select %23, %24, %25 : vector<128x1xi1>, vector<128x1xf32>
    %cst_8 = arith.constant 0.000000e+00 : f32
    %27 = vector.broadcast %cst_8 : f32 to vector<1x128xf32>
    %28 = arith.cmpf ogt, %21, %27 : vector<1x128xf32>
    %29 = math.rsqrt %21 : vector<1x128xf32>
    %cst_9 = arith.constant 0.000000e+00 : f32
    %30 = vector.broadcast %cst_9 : f32 to vector<1x128xf32>
    %31 = arith.select %28, %29, %30 : vector<1x128xi1>, vector<1x128xf32>
    %32 = vector.broadcast %26 : vector<128x1xf32> to vector<128x128xf32>
    %33 = arith.mulf %32, %17 : vector<128x128xf32>
    %34 = vector.broadcast %31 : vector<1x128xf32> to vector<128x128xf32>
    %35 = arith.mulf %33, %34 : vector<128x128xf32>
    %c0_10 = arith.constant 0 : index
    %c0_11 = arith.constant 0 : index
    %36 = vector.load %arg2[%c0_10, %c0_11] : memref<128x128xf32, #tpu.memory_space<vmem>>, vector<128x128xf32>
    %c0_12 = arith.constant 0 : index
    %c0_13 = arith.constant 0 : index
    %37 = vector.load %arg3[%c0_12, %c0_13] : memref<128x128xf32, #tpu.memory_space<vmem>>, vector<128x128xf32>
    %cst_14 = arith.constant dense<0.000000e+00> : vector<128x128xf32>
    %38 = tpu.matmul %36, %37, %cst_14 {dimension_numbers = #tpu.dot_dimension_numbers<[1], [0], [0], [1], [0, 0, 1, 1], [], []>} : vector<128x128xf32>, vector<128x128xf32>, vector<128x128xf32> -> vector<128x128xf32>
    %cst_15 = arith.constant dense<0.000000e+00> : vector<128x128xf32>
    %39 = tpu.matmul %35, %38, %cst_15 {dimension_numbers = #tpu.dot_dimension_numbers<[1], [0], [0], [1], [0, 0, 1, 1], [], []>} : vector<128x128xf32>, vector<128x128xf32>, vector<128x128xf32> -> vector<128x128xf32>
    %c0_16 = arith.constant 0 : index
    %c0_17 = arith.constant 0 : index
    %40 = vector.load %arg4[%c0_16, %c0_17] : memref<1x128xf32, #tpu.memory_space<vmem>>, vector<1x128xf32>
    %41 = vector.broadcast %40 : vector<1x128xf32> to vector<128x128xf32>
    %42 = arith.addf %39, %41 : vector<128x128xf32>
    %cst_18 = arith.constant 0.000000e+00 : f32
    %43 = vector.broadcast %cst_18 : f32 to vector<128x128xf32>
    %44 = arith.maximumf %42, %43 : vector<128x128xf32>
    %c0_19 = arith.constant 0 : index
    %c0_20 = arith.constant 0 : index
    %45 = vector.load %arg7[%c0_19, %c0_20] : memref<128x128xf32, #tpu.memory_space<vmem>>, vector<128x128xf32>
    tpu.vector_store %arg7[%c0_19, %c0_20], %44 {strides = array<i32>} : memref<128x128xf32, #tpu.memory_space<vmem>>, vector<128x128xf32>,
    %c0_21 = arith.constant 0 : index
    %c0_22 = arith.constant 0 : index
    %46 = vector.load %arg5[%c0_21, %c0_22] : memref<128x64xf32, #tpu.memory_space<vmem>>, vector<128x64xf32>
    %cst_23 = arith.constant dense<0.000000e+00> : vector<128x64xf32>
    %47 = tpu.matmul %44, %46, %cst_23 {dimension_numbers = #tpu.dot_dimension_numbers<[1], [0], [0], [1], [0, 0, 1, 1], [], []>} : vector<128x128xf32>, vector<128x64xf32>, vector<128x64xf32> -> vector<128x64xf32>
    %cst_24 = arith.constant dense<0.000000e+00> : vector<128x64xf32>
    %48 = tpu.matmul %35, %47, %cst_24 {dimension_numbers = #tpu.dot_dimension_numbers<[1], [0], [0], [1], [0, 0, 1, 1], [], []>} : vector<128x128xf32>, vector<128x64xf32>, vector<128x64xf32> -> vector<128x64xf32>
    %c0_25 = arith.constant 0 : index
    %c0_26 = arith.constant 0 : index
    %49 = vector.load %arg6[%c0_25, %c0_26] : memref<1x64xf32, #tpu.memory_space<vmem>>, vector<1x64xf32>
    %50 = vector.broadcast %49 : vector<1x64xf32> to vector<128x64xf32>
    %51 = arith.addf %48, %50 : vector<128x64xf32>
    %c0_27 = arith.constant 0 : index
    %c0_28 = arith.constant 0 : index
    %52 = vector.load %arg8[%c0_27, %c0_28] : memref<128x64xf32, #tpu.memory_space<vmem>>, vector<128x64xf32>
    tpu.vector_store %arg8[%c0_27, %c0_28], %51 {strides = array<i32>} : memref<128x64xf32, #tpu.memory_space<vmem>>, vector<128x64xf32>,
    %cst_29 = arith.constant dense<0.000000e+00> : vector<128x128xf32>
    %53 = tpu.matmul %51, %51, %cst_29 {dimension_numbers = #tpu.dot_dimension_numbers<[1], [1], [0], [0], [0, 0, 1, 0], [], []>} : vector<128x64xf32>, vector<128x64xf32>, vector<128x128xf32> -> vector<128x128xf32>
    %c0_30 = arith.constant 0 : index
    %c0_31 = arith.constant 0 : index
    %54 = vector.load %arg9[%c0_30, %c0_31] : memref<128x128xf32, #tpu.memory_space<vmem>>, vector<128x128xf32>
    tpu.vector_store %arg9[%c0_30, %c0_31], %53 {strides = array<i32>} : memref<128x128xf32, #tpu.memory_space<vmem>>, vector<128x128xf32>,
    %55 = tpu.iota {dimensions = array<i32: 1>} : vector<64x128xi32>
    %c0_32 = arith.constant 0 : index
    %c0_33 = arith.constant 0 : index
    %56 = vector.load %arg1[%c0_32, %c0_33] : memref<64x1xi32, #tpu.memory_space<vmem>>, vector<64x1xi32>
    %57 = vector.broadcast %56 : vector<64x1xi32> to vector<64x128xi32>
    %58 = arith.cmpi eq, %55, %57 : vector<64x128xi32>
    %59 = arith.extui %58 : vector<64x128xi1> to vector<64x128xi32>
    %60 = arith.sitofp %59 : vector<64x128xi32> to vector<64x128xf32>
    %cst_34 = arith.constant dense<0.000000e+00> : vector<64x64xf32>
    %61 = tpu.matmul %60, %51, %cst_34 {dimension_numbers = #tpu.dot_dimension_numbers<[1], [0], [0], [1], [0, 0, 1, 1], [], []>} : vector<64x128xf32>, vector<128x64xf32>, vector<64x64xf32> -> vector<64x64xf32>
    %62 = vector.extract_strided_slice %61 {offsets = [0, 0], sizes = [32, 64], strides = [1, 1]} : vector<64x64xf32> to vector<32x64xf32>
    %63 = vector.extract_strided_slice %61 {offsets = [32, 0], sizes = [32, 64], strides = [1, 1]} : vector<64x64xf32> to vector<32x64xf32>
    %64 = arith.mulf %62, %63 : vector<32x64xf32>
    %c0_35 = arith.constant 0 : index
    %c0_36 = arith.constant 0 : index
    %65 = vector.load %arg10[%c0_35, %c0_36] : memref<32x64xf32, #tpu.memory_space<vmem>>, vector<32x64xf32>
    tpu.vector_store %arg10[%c0_35, %c0_36], %64 {strides = array<i32>} : memref<32x64xf32, #tpu.memory_space<vmem>>, vector<32x64xf32>,
    %cst_37 = arith.constant 1.000000e+00 : f32
    %66 = vector.broadcast %cst_37 : f32 to vector<1x64xf32>
    %cst_38 = arith.constant dense<0.000000e+00> : vector<1x32xf32>
    %67 = tpu.matmul %66, %64, %cst_38 {dimension_numbers = #tpu.dot_dimension_numbers<[1], [1], [0], [0], [0, 0, 1, 0], [], []>} : vector<1x64xf32>, vector<32x64xf32>, vector<1x32xf32> -> vector<1x32xf32>
    %c0_39 = arith.constant 0 : index
    %c0_40 = arith.constant 0 : index
    %68 = vector.load %arg11[%c0_39, %c0_40] : memref<1x32xf32, #tpu.memory_space<vmem>>, vector<1x32xf32>
    tpu.vector_store %arg11[%c0_39, %c0_40], %67 {strides = array<i32>} : memref<1x32xf32, #tpu.memory_space<vmem>>, vector<1x32xf32>,
    return
  }
}

</mosaic_0001>

<llo_original>
// kernel: _net_core.1
$region0: #{_net_core.1}
  #allocation0 [shape = 'u32[]', space=smem, size = 0x4, offset = 0x4, fixed_abs, tag = 'smem constant byte address 0x4 - core index']
  #allocation1 [shape = 'u32[144,128]{1,0:T(1,128)}', space=vmem, size = 0x12000, scoped, tag = 'internal scratch']
  %s0 = inlined_call_operand.hbm [shape: s32[2,512], index: 0, kind: input, shape index: {}]
  %s1 = inlined_call_operand.vmem [shape: s32[64,1], index: 1, kind: input, shape index: {}]
  %s2 = inlined_call_operand.vmem [shape: f32[128,128], index: 2, kind: input, shape index: {}]
  %s3 = inlined_call_operand.vmem [shape: f32[128,128], index: 3, kind: input, shape index: {}]
  %s4 = inlined_call_operand.vmem [shape: f32[1,128], index: 4, kind: input, shape index: {}]
  %s5 = inlined_call_operand.vmem [shape: f32[128,64], index: 5, kind: input, shape index: {}]
  %s6 = inlined_call_operand.vmem [shape: f32[1,64], index: 6, kind: input, shape index: {}]
  %s7 = inlined_call_operand.hbm [shape: f32[128,128], index: 7, kind: output, shape index: {0}]
  %s8 = inlined_call_operand.vmem [shape: f32[128,64], index: 8, kind: output, shape index: {1}]
  %s9 = inlined_call_operand.hbm [shape: f32[128,128], index: 9, kind: output, shape index: {2}]
  %s10 = inlined_call_operand.hbm [shape: f32[32,64], index: 10, kind: output, shape index: {3}]
  %s11 = inlined_call_operand.hbm [shape: f32[1,32], index: 11, kind: output, shape index: {4}]
  %12 = xla_tuple %s7, %s8, %s9, %s10, %s11
  %s13 = sld [smem:[#allocation0]]
  $region74: #{_net_core.1} parent=0
    _
  %s15 = ssub.s32 1, %s13
  %s16 = scalar_select 0, %s15, %s13
  $region1: #{_net_core.1} parent=0
    #allocation2 [shape = 'u8[4096]{0}', space=vmem, size = 0x1000, scoped, tag = 'input window, operand 0, single buffered']
    #allocation3 [shape = 's32[1]{0}', space=sflag, size = 0x4, scoped, tag = 'scoped memory for _net_core.1']
    #allocation4 [shape = 's32[1]{0}', space=sflag, size = 0x4, scoped, tag = 'scoped memory for _net_core.1']
    #allocation5 [shape = 'u8[65536]{0}', space=vmem, size = 0x10000, scoped, tag = 'output window, operand 0, single buffered']
    #allocation6 [shape = 'u8[65536]{0}', space=vmem, size = 0x10000, scoped, tag = 'output window, operand 2, single buffered']
    #allocation7 [shape = 's32[1]{0}', space=sflag, size = 0x4, scoped, tag = 'scoped memory for _net_core.1']
    #allocation8 [shape = 'u8[16384]{0}', space=vmem, size = 0x4000, scoped, tag = 'output window, operand 3, single buffered']
    #allocation9 [shape = 'u8[512]{0}', space=vmem, size = 0x400, scoped, tag = 'output window, operand 4, single buffered']
    #allocation10 [shape = 's32[1]{0}', space=sflag, size = 0x4, scoped, tag = 'scoped memory for _net_core.1']
    %17 = vsyncpa [#allocation3], 0
    %18 = vsyncpa [#allocation4], 0
    %19 = vsyncpa [#allocation7], 0
    %20 = vsyncpa [#allocation10], 0
    // Predicated region
    $region2: #{_net_core.1} parent=1 // pred_check
      _
    $region3: #{_net_core.1} parent=1 // pred_check_branch
      %22 = sbr.rel (0) target = $region5
    $region4: #{_net_core.1} parent=1 // pred_region
      %s24 = ssub.s32 128, 128
      %25 = vsyncadd [#allocation3], %s24
      %s27 = sshll.u32 [#allocation2], 4
      %s28 = int_to_ptr.vmem [resolvable:$true] %s27
      %30 = dma.hbm_to_vmem [thread:$0]  %s0, 128, %s28, [#allocation3]
    $region5: #{_net_core.1} parent=1 // pred_fallthru
      _
    // Predicated region
    $region6: #{_net_core.1} parent=1 // pred_check
      _
    $region7: #{_net_core.1} parent=1 // pred_check_branch
      %32 = sbr.rel (0) target = $region9
    $region8: #{_net_core.1} parent=1 // pred_region
      _
    $region9: #{_net_core.1} parent=1 // pred_fallthru
      _
    // Predicated region
    $region10: #{_net_core.1} parent=1 // pred_check
      _
    $region11: #{_net_core.1} parent=1 // pred_check_branch
      %34 = sbr.rel (0) target = $region13
    $region12: #{_net_core.1} parent=1 // pred_region
      _
    $region13: #{_net_core.1} parent=1 // pred_fallthru
      _
    // Predicated region
    $region14: #{_net_core.1} parent=1 // pred_check
      _
    $region15: #{_net_core.1} parent=1 // pred_check_branch
      %36 = sbr.rel (0) target = $region17
    $region16: #{_net_core.1} parent=1 // pred_region
      _
    $region17: #{_net_core.1} parent=1 // pred_fallthru
      _
    // Predicated region
    $region18: #{_net_core.1} parent=1 // pred_check
      _
    $region19: #{_net_core.1} parent=1 // pred_check_branch
      %38 = sbr.rel (0) target = $region21
    $region20: #{_net_core.1} parent=1 // pred_region
      _
    $region21: #{_net_core.1} parent=1 // pred_fallthru
      _
    // Predicated region
    $region22: #{_net_core.1} parent=1 // pred_check
      _
    $region23: #{_net_core.1} parent=1 // pred_check_branch
      %40 = sbr.rel (0) target = $region25
    $region24: #{_net_core.1} parent=1 // pred_region
      _
    $region25: #{_net_core.1} parent=1 // pred_fallthru
      _
    // Predicated region
    $region26: #{_net_core.1} parent=1 // pred_check
      _
    $region27: #{_net_core.1} parent=1 // pred_check_branch
      %42 = sbr.rel (0) target = $region29
    $region28: #{_net_core.1} parent=1 // pred_region
      _
    $region29: #{_net_core.1} parent=1 // pred_fallthru
      _
    // Predicated region
    $region30: #{_net_core.1} parent=1 // pred_check
      _
    $region31: #{_net_core.1} parent=1 // pred_check_branch
      %44 = sbr.rel (0) target = $region33
    $region32: #{_net_core.1} parent=1 // pred_region
      %45 = dma.done [#allocation3], 128
    $region33: #{_net_core.1} parent=1 // pred_fallthru
      _
    %v46 = vlaneseq
    %v47 = vshrl.u32 %v46, 7
    %v48 = vadd.s32 %v47, 8
    %v49 = vadd.s32 %v47, 16
    %v50 = vadd.s32 %v47, 24
    %v51 = vadd.s32 %v47, 32
    %v52 = vadd.s32 %v47, 40
    %v53 = vadd.s32 %v47, 48
    %v54 = vadd.s32 %v47, 56
    %v55 = vadd.s32 %v47, 64
    %v56 = vadd.s32 %v47, 72
    %v57 = vadd.s32 %v47, 80
    %v58 = vadd.s32 %v47, 88
    %v59 = vadd.s32 %v47, 96
    %v60 = vadd.s32 %v47, 104
    %v61 = vadd.s32 %v47, 112
    %v62 = vadd.s32 %v47, 120
    %v63 = vld [vmem:[#allocation2] ss:$2 sm:$0xf]
    %s64 = scalar_lea.vmem [#allocation2], 1
    %v65 = vld [vmem:[%s64] ss:$2 sm:$0xf]
    %v66 = vlaneseq
    %v67 = vshrl.u32 %v66, 7
    %v68 = vsub.s32 0, %v67
    %v69 = vrot.slane %v65, %v68
    %v70 = vlaneseq
    %v71 = vshrl.u32 %v70, 7
    %v72 = vsub.s32 1, %v71
    %v73 = vrot.slane %v65, %v72
    %v74 = vlaneseq
    %v75 = vshrl.u32 %v74, 7
    %v76 = vsub.s32 2, %v75
    %v77 = vrot.slane %v65, %v76
    %v78 = vlaneseq
    %v79 = vshrl.u32 %v78, 7
    %v80 = vsub.s32 3, %v79
    %v81 = vrot.slane %v65, %v80
    %vm82 = vcmp.eq.s32.totalorder %v47, %v69
    %vm83 = vcmp.eq.s32.totalorder %v47, %v73
    %vm84 = vcmp.eq.s32.totalorder %v47, %v77
    %vm85 = vcmp.eq.s32.totalorder %v47, %v81
    %vm86 = vcmp.eq.s32.totalorder %v48, %v69
    %vm87 = vcmp.eq.s32.totalorder %v48, %v73
    %vm88 = vcmp.eq.s32.totalorder %v48, %v77
    %vm89 = vcmp.eq.s32.totalorder %v48, %v81
    %vm90 = vcmp.eq.s32.totalorder %v49, %v69
    %vm91 = vcmp.eq.s32.totalorder %v49, %v73
    %vm92 = vcmp.eq.s32.totalorder %v49, %v77
    %vm93 = vcmp.eq.s32.totalorder %v49, %v81
    %vm94 = vcmp.eq.s32.totalorder %v50, %v69
    %vm95 = vcmp.eq.s32.totalorder %v50, %v73
    %vm96 = vcmp.eq.s32.totalorder %v50, %v77
    %vm97 = vcmp.eq.s32.totalorder %v50, %v81
    %vm98 = vcmp.eq.s32.totalorder %v51, %v69
    %vm99 = vcmp.eq.s32.totalorder %v51, %v73
    %vm100 = vcmp.eq.s32.totalorder %v51, %v77
    %vm101 = vcmp.eq.s32.totalorder %v51, %v81
    %vm102 = vcmp.eq.s32.totalorder %v52, %v69
    %vm103 = vcmp.eq.s32.totalorder %v52, %v73
    %vm104 = vcmp.eq.s32.totalorder %v52, %v77
    %vm105 = vcmp.eq.s32.totalorder %v52, %v81
    %vm106 = vcmp.eq.s32.totalorder %v53, %v69
    %vm107 = vcmp.eq.s32.totalorder %v53, %v73
    %vm108 = vcmp.eq.s32.totalorder %v53, %v77
    %vm109 = vcmp.eq.s32.totalorder %v53, %v81
    %vm110 = vcmp.eq.s32.totalorder %v54, %v69
    %vm111 = vcmp.eq.s32.totalorder %v54, %v73
    %vm112 = vcmp.eq.s32.totalorder %v54, %v77
    %vm113 = vcmp.eq.s32.totalorder %v54, %v81
    %vm114 = vcmp.eq.s32.totalorder %v55, %v69
    %vm115 = vcmp.eq.s32.totalorder %v55, %v73
    %vm116 = vcmp.eq.s32.totalorder %v55, %v77
    %vm117 = vcmp.eq.s32.totalorder %v55, %v81
    %vm118 = vcmp.eq.s32.totalorder %v56, %v69
    %vm119 = vcmp.eq.s32.totalorder %v56, %v73
    %vm120 = vcmp.eq.s32.totalorder %v56, %v77
    %vm121 = vcmp.eq.s32.totalorder %v56, %v81
    %vm122 = vcmp.eq.s32.totalorder %v57, %v69
    %vm123 = vcmp.eq.s32.totalorder %v57, %v73
    %vm124 = vcmp.eq.s32.totalorder %v57, %v77
    %vm125 = vcmp.eq.s32.totalorder %v57, %v81
    %vm126 = vcmp.eq.s32.totalorder %v58, %v69
    %vm127 = vcmp.eq.s32.totalorder %v58, %v73
    %vm128 = vcmp.eq.s32.totalorder %v58, %v77
    %vm129 = vcmp.eq.s32.totalorder %v58, %v81
    %vm130 = vcmp.eq.s32.totalorder %v59, %v69
    %vm131 = vcmp.eq.s32.totalorder %v59, %v73
    %vm132 = vcmp.eq.s32.totalorder %v59, %v77
    %vm133 = vcmp.eq.s32.totalorder %v59, %v81
    %vm134 = vcmp.eq.s32.totalorder %v60, %v69
    %vm135 = vcmp.eq.s32.totalorder %v60, %v73
    %vm136 = vcmp.eq.s32.totalorder %v60, %v77
    %vm137 = vcmp.eq.s32.totalorder %v60, %v81
    %vm138 = vcmp.eq.s32.totalorder %v61, %v69
    %vm139 = vcmp.eq.s32.totalorder %v61, %v73
    %vm140 = vcmp.eq.s32.totalorder %v61, %v77
    %vm141 = vcmp.eq.s32.totalorder %v61, %v81
    %vm142 = vcmp.eq.s32.totalorder %v62, %v69
    %vm143 = vcmp.eq.s32.totalorder %v62, %v73
    %vm144 = vcmp.eq.s32.totalorder %v62, %v77
    %vm145 = vcmp.eq.s32.totalorder %v62, %v81
    %v146 = vsel %vm82, 1, 0
    %v147 = vsel %vm83, 1, 0
    %v148 = vsel %vm84, 1, 0
    %v149 = vsel %vm85, 1, 0
    %v150 = vsel %vm86, 1, 0
    %v151 = vsel %vm87, 1, 0
    %v152 = vsel %vm88, 1, 0
    %v153 = vsel %vm89, 1, 0
    %v154 = vsel %vm90, 1, 0
    %v155 = vsel %vm91, 1, 0
    %v156 = vsel %vm92, 1, 0
    %v157 = vsel %vm93, 1, 0
    %v158 = vsel %vm94, 1, 0
    %v159 = vsel %vm95, 1, 0
    %v160 = vsel %vm96, 1, 0
    %v161 = vsel %vm97, 1, 0
    %v162 = vsel %vm98, 1, 0
    %v163 = vsel %vm99, 1, 0
    %v164 = vsel %vm100, 1, 0
    %v165 = vsel %vm101, 1, 0
    %v166 = vsel %vm102, 1, 0
    %v167 = vsel %vm103, 1, 0
    %v168 = vsel %vm104, 1, 0
    %v169 = vsel %vm105, 1, 0
    %v170 = vsel %vm106, 1, 0
    %v171 = vsel %vm107, 1, 0
    %v172 = vsel %vm108, 1, 0
    %v173 = vsel %vm109, 1, 0
    %v174 = vsel %vm110, 1, 0
    %v175 = vsel %vm111, 1, 0
    %v176 = vsel %vm112, 1, 0
    %v177 = vsel %vm113, 1, 0
    %v178 = vsel %vm114, 1, 0
    %v179 = vsel %vm115, 1, 0
    %v180 = vsel %vm116, 1, 0
    %v181 = vsel %vm117, 1, 0
    %v182 = vsel %vm118, 1, 0
    %v183 = vsel %vm119, 1, 0
    %v184 = vsel %vm120, 1, 0
    %v185 = vsel %vm121, 1, 0
    %v186 = vsel %vm122, 1, 0
    %v187 = vsel %vm123, 1, 0
    %v188 = vsel %vm124, 1, 0
    %v189 = vsel %vm125, 1, 0
    %v190 = vsel %vm126, 1, 0
    %v191 = vsel %vm127, 1, 0
    %v192 = vsel %vm128, 1, 0
    %v193 = vsel %vm129, 1, 0
    %v194 = vsel %vm130, 1, 0
    %v195 = vsel %vm131, 1, 0
    %v196 = vsel %vm132, 1, 0
    %v197 = vsel %vm133, 1, 0
    %v198 = vsel %vm134, 1, 0
    %v199 = vsel %vm135, 1, 0
    %v200 = vsel %vm136, 1, 0
    %v201 = vsel %vm137, 1, 0
    %v202 = vsel %vm138, 1, 0
    %v203 = vsel %vm139, 1, 0
    %v204 = vsel %vm140, 1, 0
    %v205 = vsel %vm141, 1, 0
    %v206 = vsel %vm142, 1, 0
    %v207 = vsel %vm143, 1, 0
    %v208 = vsel %vm144, 1, 0
    %v209 = vsel %vm145, 1, 0
    %v210 = vcvt.s32.f32 %v146
    %v211 = vcvt.s32.f32 %v147
    %v212 = vcvt.s32.f32 %v148
    %v213 = vcvt.s32.f32 %v149
    %v214 = vcvt.s32.f32 %v150
    %v215 = vcvt.s32.f32 %v151
    %v216 = vcvt.s32.f32 %v152
    %v217 = vcvt.s32.f32 %v153
    %v218 = vcvt.s32.f32 %v154
    %v219 = vcvt.s32.f32 %v155
    %v220 = vcvt.s32.f32 %v156
    %v221 = vcvt.s32.f32 %v157
    %v222 = vcvt.s32.f32 %v158
    %v223 = vcvt.s32.f32 %v159
    %v224 = vcvt.s32.f32 %v160
    %v225 = vcvt.s32.f32 %v161
    %v226 = vcvt.s32.f32 %v162
    %v227 = vcvt.s32.f32 %v163
    %v228 = vcvt.s32.f32 %v164
    %v229 = vcvt.s32.f32 %v165
    %v230 = vcvt.s32.f32 %v166
    %v231 = vcvt.s32.f32 %v167
    %v232 = vcvt.s32.f32 %v168
    %v233 = vcvt.s32.f32 %v169
    %v234 = vcvt.s32.f32 %v170
    %v235 = vcvt.s32.f32 %v171
    %v236 = vcvt.s32.f32 %v172
    %v237 = vcvt.s32.f32 %v173
    %v238 = vcvt.s32.f32 %v174
    %v239 = vcvt.s32.f32 %v175
    %v240 = vcvt.s32.f32 %v176
    %v241 = vcvt.s32.f32 %v177
    %v242 = vcvt.s32.f32 %v178
    %v243 = vcvt.s32.f32 %v179
    %v244 = vcvt.s32.f32 %v180
    %v245 = vcvt.s32.f32 %v181
    %v246 = vcvt.s32.f32 %v182
    %v247 = vcvt.s32.f32 %v183
    %v248 = vcvt.s32.f32 %v184
    %v249 = vcvt.s32.f32 %v185
    %v250 = vcvt.s32.f32 %v186
    %v251 = vcvt.s32.f32 %v187
    %v252 = vcvt.s32.f32 %v188
    %v253 = vcvt.s32.f32 %v189
    %v254 = vcvt.s32.f32 %v190
    %v255 = vcvt.s32.f32 %v191
    %v256 = vcvt.s32.f32 %v192
    %v257 = vcvt.s32.f32 %v193
    %v258 = vcvt.s32.f32 %v194
    %v259 = vcvt.s32.f32 %v195
    %v260 = vcvt.s32.f32 %v196
    %v261 = vcvt.s32.f32 %v197
    %v262 = vcvt.s32.f32 %v198
    %v263 = vcvt.s32.f32 %v199
    %v264 = vcvt.s32.f32 %v200
    %v265 = vcvt.s32.f32 %v201
    %v266 = vcvt.s32.f32 %v202
    %v267 = vcvt.s32.f32 %v203
    %v268 = vcvt.s32.f32 %v204
    %v269 = vcvt.s32.f32 %v205
    %v270 = vcvt.s32.f32 %v206
    %v271 = vcvt.s32.f32 %v207
    %v272 = vcvt.s32.f32 %v208
    %v273 = vcvt.s32.f32 %v209
    %v274 = vlaneseq
    %v275 = vshrl.u32 %v274, 7
    %v276 = vsub.s32 0, %v275
    %v277 = vrot.slane %v63, %v276
    %v278 = vlaneseq
    %v279 = vshrl.u32 %v278, 7
    %v280 = vsub.s32 1, %v279
    %v281 = vrot.slane %v63, %v280
    %v282 = vlaneseq
    %v283 = vshrl.u32 %v282, 7
    %v284 = vsub.s32 2, %v283
    %v285 = vrot.slane %v63, %v284
    %v286 = vlaneseq
    %v287 = vshrl.u32 %v286, 7
    %v288 = vsub.s32 3, %v287
    %v289 = vrot.slane %v63, %v288
    %vm290 = vcmp.eq.s32.totalorder %v47, %v277
    %vm291 = vcmp.eq.s32.totalorder %v47, %v281
    %vm292 = vcmp.eq.s32.totalorder %v47, %v285
    %vm293 = vcmp.eq.s32.totalorder %v47, %v289
    %vm294 = vcmp.eq.s32.totalorder %v48, %v277
    %vm295 = vcmp.eq.s32.totalorder %v48, %v281
    %vm296 = vcmp.eq.s32.totalorder %v48, %v285
    %vm297 = vcmp.eq.s32.totalorder %v48, %v289
    %vm298 = vcmp.eq.s32.totalorder %v49, %v277
    %vm299 = vcmp.eq.s32.totalorder %v49, %v281
    %vm300 = vcmp.eq.s32.totalorder %v49, %v285
    %vm301 = vcmp.eq.s32.totalorder %v49, %v289
    %vm302 = vcmp.eq.s32.totalorder %v50, %v277
    %vm303 = vcmp.eq.s32.totalorder %v50, %v281
    %vm304 = vcmp.eq.s32.totalorder %v50, %v285
    %vm305 = vcmp.eq.s32.totalorder %v50, %v289
    %vm306 = vcmp.eq.s32.totalorder %v51, %v277
    %vm307 = vcmp.eq.s32.totalorder %v51, %v281
    %vm308 = vcmp.eq.s32.totalorder %v51, %v285
    %vm309 = vcmp.eq.s32.totalorder %v51, %v289
    %vm310 = vcmp.eq.s32.totalorder %v52, %v277
    %vm311 = vcmp.eq.s32.totalorder %v52, %v281
    %vm312 = vcmp.eq.s32.totalorder %v52, %v285
    %vm313 = vcmp.eq.s32.totalorder %v52, %v289
    %vm314 = vcmp.eq.s32.totalorder %v53, %v277
    %vm315 = vcmp.eq.s32.totalorder %v53, %v281
    %vm316 = vcmp.eq.s32.totalorder %v53, %v285
    %vm317 = vcmp.eq.s32.totalorder %v53, %v289
    %vm318 = vcmp.eq.s32.totalorder %v54, %v277
    %vm319 = vcmp.eq.s32.totalorder %v54, %v281
    %vm320 = vcmp.eq.s32.totalorder %v54, %v285
    %vm321 = vcmp.eq.s32.totalorder %v54, %v289
    %vm322 = vcmp.eq.s32.totalorder %v55, %v277
    %vm323 = vcmp.eq.s32.totalorder %v55, %v281
    %vm324 = vcmp.eq.s32.totalorder %v55, %v285
    %vm325 = vcmp.eq.s32.totalorder %v55, %v289
    %vm326 = vcmp.eq.s32.totalorder %v56, %v277
    %vm327 = vcmp.eq.s32.totalorder %v56, %v281
    %vm328 = vcmp.eq.s32.totalorder %v56, %v285
    %vm329 = vcmp.eq.s32.totalorder %v56, %v289
    %vm330 = vcmp.eq.s32.totalorder %v57, %v277
    %vm331 = vcmp.eq.s32.totalorder %v57, %v281
    %vm332 = vcmp.eq.s32.totalorder %v57, %v285
    %vm333 = vcmp.eq.s32.totalorder %v57, %v289
    %vm334 = vcmp.eq.s32.totalorder %v58, %v277
    %vm335 = vcmp.eq.s32.totalorder %v58, %v281
    %vm336 = vcmp.eq.s32.totalorder %v58, %v285
    %vm337 = vcmp.eq.s32.totalorder %v58, %v289
    %vm338 = vcmp.eq.s32.totalorder %v59, %v277
    %vm339 = vcmp.eq.s32.totalorder %v59, %v281
    %vm340 = vcmp.eq.s32.totalorder %v59, %v285
    %vm341 = vcmp.eq.s32.totalorder %v59, %v289
    %vm342 = vcmp.eq.s32.totalorder %v60, %v277
    %vm343 = vcmp.eq.s32.totalorder %v60, %v281
    %vm344 = vcmp.eq.s32.totalorder %v60, %v285
    %vm345 = vcmp.eq.s32.totalorder %v60, %v289
    %vm346 = vcmp.eq.s32.totalorder %v61, %v277
    %vm347 = vcmp.eq.s32.totalorder %v61, %v281
    %vm348 = vcmp.eq.s32.totalorder %v61, %v285
    %vm349 = vcmp.eq.s32.totalorder %v61, %v289
    %vm350 = vcmp.eq.s32.totalorder %v62, %v277
    %vm351 = vcmp.eq.s32.totalorder %v62, %v281
    %vm352 = vcmp.eq.s32.totalorder %v62, %v285
    %vm353 = vcmp.eq.s32.totalorder %v62, %v289
    %v354 = vsel %vm290, 1, 0
    %v355 = vsel %vm291, 1, 0
    %v356 = vsel %vm292, 1, 0
    %v357 = vsel %vm293, 1, 0
    %v358 = vsel %vm294, 1, 0
    %v359 = vsel %vm295, 1, 0
    %v360 = vsel %vm296, 1, 0
    %v361 = vsel %vm297, 1, 0
    %v362 = vsel %vm298, 1, 0
    %v363 = vsel %vm299, 1, 0
    %v364 = vsel %vm300, 1, 0
    %v365 = vsel %vm301, 1, 0
    %v366 = vsel %vm302, 1, 0
    %v367 = vsel %vm303, 1, 0
    %v368 = vsel %vm304, 1, 0
    %v369 = vsel %vm305, 1, 0
    %v370 = vsel %vm306, 1, 0
    %v371 = vsel %vm307, 1, 0
    %v372 = vsel %vm308, 1, 0
    %v373 = vsel %vm309, 1, 0
    %v374 = vsel %vm310, 1, 0
    %v375 = vsel %vm311, 1, 0
    %v376 = vsel %vm312, 1, 0
    %v377 = vsel %vm313, 1, 0
    %v378 = vsel %vm314, 1, 0
    %v379 = vsel %vm315, 1, 0
    %v380 = vsel %vm316, 1, 0
    %v381 = vsel %vm317, 1, 0
    %v382 = vsel %vm318, 1, 0
    %v383 = vsel %vm319, 1, 0
    %v384 = vsel %vm320, 1, 0
    %v385 = vsel %vm321, 1, 0
    %v386 = vsel %vm322, 1, 0
    %v387 = vsel %vm323, 1, 0
    %v388 = vsel %vm324, 1, 0
    %v389 = vsel %vm325, 1, 0
    %v390 = vsel %vm326, 1, 0
    %v391 = vsel %vm327, 1, 0
    %v392 = vsel %vm328, 1, 0
    %v393 = vsel %vm329, 1, 0
    %v394 = vsel %vm330, 1, 0
    %v395 = vsel %vm331, 1, 0
    %v396 = vsel %vm332, 1, 0
    %v397 = vsel %vm333, 1, 0
    %v398 = vsel %vm334, 1, 0
    %v399 = vsel %vm335, 1, 0
    %v400 = vsel %vm336, 1, 0
    %v401 = vsel %vm337, 1, 0
    %v402 = vsel %vm338, 1, 0
    %v403 = vsel %vm339, 1, 0
    %v404 = vsel %vm340, 1, 0
    %v405 = vsel %vm341, 1, 0
    %v406 = vsel %vm342, 1, 0
    %v407 = vsel %vm343, 1, 0
    %v408 = vsel %vm344, 1, 0
    %v409 = vsel %vm345, 1, 0
    %v410 = vsel %vm346, 1, 0
    %v411 = vsel %vm347, 1, 0
    %v412 = vsel %vm348, 1, 0
    %v413 = vsel %vm349, 1, 0
    %v414 = vsel %vm350, 1, 0
    %v415 = vsel %vm351, 1, 0
    %v416 = vsel %vm352, 1, 0
    %v417 = vsel %vm353, 1, 0
    %v418 = vcvt.s32.f32 %v354
    %v419 = vcvt.s32.f32 %v355
    %v420 = vcvt.s32.f32 %v356
    %v421 = vcvt.s32.f32 %v357
    %v422 = vcvt.s32.f32 %v358
    %v423 = vcvt.s32.f32 %v359
    %v424 = vcvt.s32.f32 %v360
    %v425 = vcvt.s32.f32 %v361
    %v426 = vcvt.s32.f32 %v362
    %v427 = vcvt.s32.f32 %v363
    %v428 = vcvt.s32.f32 %v364
    %v429 = vcvt.s32.f32 %v365
    %v430 = vcvt.s32.f32 %v366
    %v431 = vcvt.s32.f32 %v367
    %v432 = vcvt.s32.f32 %v368
    %v433 = vcvt.s32.f32 %v369
    %v434 = vcvt.s32.f32 %v370
    %v435 = vcvt.s32.f32 %v371
    %v436 = vcvt.s32.f32 %v372
    %v437 = vcvt.s32.f32 %v373
    %v438 = vcvt.s32.f32 %v374
    %v439 = vcvt.s32.f32 %v375
    %v440 = vcvt.s32.f32 %v376
    %v441 = vcvt.s32.f32 %v377
    %v442 = vcvt.s32.f32 %v378
    %v443 = vcvt.s32.f32 %v379
    %v444 = vcvt.s32.f32 %v380
    %v445 = vcvt.s32.f32 %v381
    %v446 = vcvt.s32.f32 %v382
    %v447 = vcvt.s32.f32 %v383
    %v448 = vcvt.s32.f32 %v384
    %v449 = vcvt.s32.f32 %v385
    %v450 = vcvt.s32.f32 %v386
    %v451 = vcvt.s32.f32 %v387
    %v452 = vcvt.s32.f32 %v388
    %v453 = vcvt.s32.f32 %v389
    %v454 = vcvt.s32.f32 %v390
    %v455 = vcvt.s32.f32 %v391
    %v456 = vcvt.s32.f32 %v392
    %v457 = vcvt.s32.f32 %v393
    %v458 = vcvt.s32.f32 %v394
    %v459 = vcvt.s32.f32 %v395
    %v460 = vcvt.s32.f32 %v396
    %v461 = vcvt.s32.f32 %v397
    %v462 = vcvt.s32.f32 %v398
    %v463 = vcvt.s32.f32 %v399
    %v464 = vcvt.s32.f32 %v400
    %v465 = vcvt.s32.f32 %v401
    %v466 = vcvt.s32.f32 %v402
    %v467 = vcvt.s32.f32 %v403
    %v468 = vcvt.s32.f32 %v404
    %v469 = vcvt.s32.f32 %v405
    %v470 = vcvt.s32.f32 %v406
    %v471 = vcvt.s32.f32 %v407
    %v472 = vcvt.s32.f32 %v408
    %v473 = vcvt.s32.f32 %v409
    %v474 = vcvt.s32.f32 %v410
    %v475 = vcvt.s32.f32 %v411
    %v476 = vcvt.s32.f32 %v412
    %v477 = vcvt.s32.f32 %v413
    %v478 = vcvt.s32.f32 %v414
    %v479 = vcvt.s32.f32 %v415
    %v480 = vcvt.s32.f32 %v416
    %v481 = vcvt.s32.f32 %v417
    %v482 = vlaneseq
    %v483 = vand.u32 %v482, 127
    %vm484 = vcmp.eq.s32.totalorder %v47, %v483
    %vm485 = vcmp.eq.s32.totalorder %v48, %v483
    %vm486 = vcmp.eq.s32.totalorder %v49, %v483
    %vm487 = vcmp.eq.s32.totalorder %v50, %v483
    %vm488 = vcmp.eq.s32.totalorder %v51, %v483
    %vm489 = vcmp.eq.s32.totalorder %v52, %v483
    %vm490 = vcmp.eq.s32.totalorder %v53, %v483
    %vm491 = vcmp.eq.s32.totalorder %v54, %v483
    %vm492 = vcmp.eq.s32.totalorder %v55, %v483
    %vm493 = vcmp.eq.s32.totalorder %v56, %v483
    %vm494 = vcmp.eq.s32.totalorder %v57, %v483
    %vm495 = vcmp.eq.s32.totalorder %v58, %v483
    %vm496 = vcmp.eq.s32.totalorder %v59, %v483
    %vm497 = vcmp.eq.s32.totalorder %v60, %v483
    %vm498 = vcmp.eq.s32.totalorder %v61, %v483
    %vm499 = vcmp.eq.s32.totalorder %v62, %v483
    %v500 = vsel %vm484, 1, 0
    %v501 = vsel %vm485, 1, 0
    %v502 = vsel %vm486, 1, 0
    %v503 = vsel %vm487, 1, 0
    %v504 = vsel %vm488, 1, 0
    %v505 = vsel %vm489, 1, 0
    %v506 = vsel %vm490, 1, 0
    %v507 = vsel %vm491, 1, 0
    %v508 = vsel %vm492, 1, 0
    %v509 = vsel %vm493, 1, 0
    %v510 = vsel %vm494, 1, 0
    %v511 = vsel %vm495, 1, 0
    %v512 = vsel %vm496, 1, 0
    %v513 = vsel %vm497, 1, 0
    %v514 = vsel %vm498, 1, 0
    %v515 = vsel %vm499, 1, 0
    %v516 = vcvt.s32.f32 %v500
    %v517 = vcvt.s32.f32 %v501
    %v518 = vcvt.s32.f32 %v502
    %v519 = vcvt.s32.f32 %v503
    %v520 = vcvt.s32.f32 %v504
    %v521 = vcvt.s32.f32 %v505
    %v522 = vcvt.s32.f32 %v506
    %v523 = vcvt.s32.f32 %v507
    %v524 = vcvt.s32.f32 %v508
    %v525 = vcvt.s32.f32 %v509
    %v526 = vcvt.s32.f32 %v510
    %v527 = vcvt.s32.f32 %v511
    %v528 = vcvt.s32.f32 %v512
    %v529 = vcvt.s32.f32 %v513
    %v530 = vcvt.s32.f32 %v514
    %v531 = vcvt.s32.f32 %v515
    %532 = vmatprep.subr.mxu0 %v479
    %533 = vmatpush1.xpose.msra.mxu0 %v478
    %534 = vmatprep.subr.mxu0 %v475
    %535 = vmatpush1.xpose.msra.mxu0 %v474
    %536 = vmatprep.subr.mxu0 %v471
    %537 = vmatpush1.xpose.msra.mxu0 %v470
    %538 = vmatprep.subr.mxu0 %v467
    %539 = vmatpush1.xpose.msra.mxu0 %v466
    %540 = vmatprep.subr.mxu0 %v463
    %541 = vmatpush1.xpose.msra.mxu0 %v462
    %542 = vmatprep.subr.mxu0 %v459
    %543 = vmatpush1.xpose.msra.mxu0 %v458
    %544 = vmatprep.subr.mxu0 %v455
    %545 = vmatpush1.xpose.msra.mxu0 %v454
    %546 = vmatprep.subr.mxu0 %v451
    %547 = vmatpush1.xpose.msra.mxu0 %v450
    %548 = vmatprep.subr.mxu0 %v447
    %549 = vmatpush1.xpose.msra.mxu0 %v446
    %550 = vmatprep.subr.mxu0 %v443
    %551 = vmatpush1.xpose.msra.mxu0 %v442
    %552 = vmatprep.subr.mxu0 %v439
    %553 = vmatpush1.xpose.msra.mxu0 %v438
    %554 = vmatprep.subr.mxu0 %v435
    %555 = vmatpush1.xpose.msra.mxu0 %v434
    %556 = vmatprep.subr.mxu0 %v431
    %557 = vmatpush1.xpose.msra.mxu0 %v430
    %558 = vmatprep.subr.mxu0 %v427
    %559 = vmatpush1.xpose.msra.mxu0 %v426
    %560 = vmatprep.subr.mxu0 %v423
    %561 = vmatpush1.xpose.msra.mxu0 %v422
    %562 = vmatprep.subr.mxu0 %v419
    %563 = vmatpush1.xpose.msra.mxu0 %v418
    %564 = vmatprep.subr.mxu0 0.0
    %565 = vmatpush2.xpose.msra.mxu0 0.0
    %566 = vmatprep.subr.mxu0 0.0
    %567 = vmatpush2.xpose.msra.mxu0 0.0
    %568 = vmatprep.subr.mxu0 0.0
    %569 = vmatpush2.xpose.msra.mxu0 0.0
    %570 = vmatprep.subr.mxu0 0.0
    %571 = vmatpush2.xpose.msra.mxu0 0.0
    %572 = vmatprep.subr.mxu0 0.0
    %573 = vmatpush2.xpose.msra.mxu0 0.0
    %574 = vmatprep.subr.mxu0 0.0
    %575 = vmatpush2.xpose.msra.mxu0 0.0
    %576 = vmatprep.subr.mxu0 0.0
    %577 = vmatpush2.xpose.msra.mxu0 0.0
    %578 = vmatprep.subr.mxu0 0.0
    %579 = vmatpush2.xpose.msra.mxu0 0.0
    %580 = vmatprep.subr.mxu0 0.0
    %581 = vmatpush2.xpose.msra.mxu0 0.0
    %582 = vmatprep.subr.mxu0 0.0
    %583 = vmatpush2.xpose.msra.mxu0 0.0
    %584 = vmatprep.subr.mxu0 0.0
    %585 = vmatpush2.xpose.msra.mxu0 0.0
    %586 = vmatprep.subr.mxu0 0.0
    %587 = vmatpush2.xpose.msra.mxu0 0.0
    %588 = vmatprep.subr.mxu0 0.0
    %589 = vmatpush2.xpose.msra.mxu0 0.0
    %590 = vmatprep.subr.mxu0 0.0
    %591 = vmatpush2.xpose.msra.mxu0 0.0
    %592 = vmatprep.subr.mxu0 0.0
    %593 = vmatpush2.xpose.msra.mxu0 0.0
    %594 = vmatprep.subr.mxu0 0.0
    %595 = vmatpush2.xpose.msra.mxu0 0.0
    %596 = vmatprep.mubr.f32.mxu0 %v211
    %597 = vmatmul.mubr.f32.gmra.mxu0 %v210
    %v598 = vpop.f32.mrf.mxu0
    %v599 = vadd.f32 %v516, %v598
    %v600 = vpop.f32.mrf.mxu0
    %601 = vmatprep.mubr.f32.mxu0 %v215
    %602 = vmatmul.mubr.f32.gmra.mxu0 %v214
    %v603 = vpop.f32.mrf.mxu0
    %v604 = vadd.f32 %v517, %v603
    %v605 = vpop.f32.mrf.mxu0
    %606 = vmatprep.mubr.f32.mxu0 %v219
    %607 = vmatmul.mubr.f32.gmra.mxu0 %v218
    %v608 = vpop.f32.mrf.mxu0
    %v609 = vadd.f32 %v518, %v608
    %v610 = vpop.f32.mrf.mxu0
    %611 = vmatprep.mubr.f32.mxu0 %v223
    %612 = vmatmul.mubr.f32.gmra.mxu0 %v222
    %v613 = vpop.f32.mrf.mxu0
    %v614 = vadd.f32 %v519, %v613
    %v615 = vpop.f32.mrf.mxu0
    %616 = vmatprep.mubr.f32.mxu0 %v227
    %617 = vmatmul.mubr.f32.gmra.mxu0 %v226
    %v618 = vpop.f32.mrf.mxu0
    %v619 = vadd.f32 %v520, %v618
    %v620 = vpop.f32.mrf.mxu0
    %621 = vmatprep.mubr.f32.mxu0 %v231
    %622 = vmatmul.mubr.f32.gmra.mxu0 %v230
    %v623 = vpop.f32.mrf.mxu0
    %v624 = vadd.f32 %v521, %v623
    %v625 = vpop.f32.mrf.mxu0
    %626 = vmatprep.mubr.f32.mxu0 %v235
    %627 = vmatmul.mubr.f32.gmra.mxu0 %v234
    %v628 = vpop.f32.mrf.mxu0
    %v629 = vadd.f32 %v522, %v628
    %v630 = vpop.f32.mrf.mxu0
    %631 = vmatprep.mubr.f32.mxu0 %v239
    %632 = vmatmul.mubr.f32.gmra.mxu0 %v238
    %v633 = vpop.f32.mrf.mxu0
    %v634 = vadd.f32 %v523, %v633
    %v635 = vpop.f32.mrf.mxu0
    %636 = vmatprep.mubr.f32.mxu0 %v243
    %637 = vmatmul.mubr.f32.gmra.mxu0 %v242
    %v638 = vpop.f32.mrf.mxu0
    %v639 = vadd.f32 %v524, %v638
    %v640 = vpop.f32.mrf.mxu0
    %641 = vmatprep.mubr.f32.mxu0 %v247
    %642 = vmatmul.mubr.f32.gmra.mxu0 %v246
    %v643 = vpop.f32.mrf.mxu0
    %v644 = vadd.f32 %v525, %v643
    %v645 = vpop.f32.mrf.mxu0
    %646 = vmatprep.mubr.f32.mxu0 %v251
    %647 = vmatmul.mubr.f32.gmra.mxu0 %v250
    %v648 = vpop.f32.mrf.mxu0
    %v649 = vadd.f32 %v526, %v648
    %v650 = vpop.f32.mrf.mxu0
    %651 = vmatprep.mubr.f32.mxu0 %v255
    %652 = vmatmul.mubr.f32.gmra.mxu0 %v254
    %v653 = vpop.f32.mrf.mxu0
    %v654 = vadd.f32 %v527, %v653
    %v655 = vpop.f32.mrf.mxu0
    %656 = vmatprep.mubr.f32.mxu0 %v259
    %657 = vmatmul.mubr.f32.gmra.mxu0 %v258
    %v658 = vpop.f32.mrf.mxu0
    %v659 = vadd.f32 %v528, %v658
    %v660 = vpop.f32.mrf.mxu0
    %661 = vmatprep.mubr.f32.mxu0 %v263
    %662 = vmatmul.mubr.f32.gmra.mxu0 %v262
    %v663 = vpop.f32.mrf.mxu0
    %v664 = vadd.f32 %v529, %v663
    %v665 = vpop.f32.mrf.mxu0
    %666 = vmatprep.mubr.f32.mxu0 %v267
    %667 = vmatmul.mubr.f32.gmra.mxu0 %v266
    %v668 = vpop.f32.mrf.mxu0
    %v669 = vadd.f32 %v530, %v668
    %v670 = vpop.f32.mrf.mxu0
    %671 = vmatprep.mubr.f32.mxu0 %v271
    %672 = vmatmul.mubr.f32.gmra.mxu0 %v270
    %v673 = vpop.f32.mrf.mxu0
    %v674 = vadd.f32 %v531, %v673
    %v675 = vpop.f32.mrf.mxu0
    %676 = vdwg.mxu0
    %677 = vmatprep.subr.mxu0 %v481
    %678 = vmatpush1.xpose.msra.mxu0 %v480
    %679 = vmatprep.subr.mxu0 %v477
    %680 = vmatpush1.xpose.msra.mxu0 %v476
    %681 = vmatprep.subr.mxu0 %v473
    %682 = vmatpush1.xpose.msra.mxu0 %v472
    %683 = vmatprep.subr.mxu0 %v469
    %684 = vmatpush1.xpose.msra.mxu0 %v468
    %685 = vmatprep.subr.mxu0 %v465
    %686 = vmatpush1.xpose.msra.mxu0 %v464
    %687 = vmatprep.subr.mxu0 %v461
    %688 = vmatpush1.xpose.msra.mxu0 %v460
    %689 = vmatprep.subr.mxu0 %v457
    %690 = vmatpush1.xpose.msra.mxu0 %v456
    %691 = vmatprep.subr.mxu0 %v453
    %692 = vmatpush1.xpose.msra.mxu0 %v452
    %693 = vmatprep.subr.mxu0 %v449
    %694 = vmatpush1.xpose.msra.mxu0 %v448
    %695 = vmatprep.subr.mxu0 %v445
    %696 = vmatpush1.xpose.msra.mxu0 %v444
    %697 = vmatprep.subr.mxu0 %v441
    %698 = vmatpush1.xpose.msra.mxu0 %v440
    %699 = vmatprep.subr.mxu0 %v437
    %700 = vmatpush1.xpose.msra.mxu0 %v436
    %701 = vmatprep.subr.mxu0 %v433
    %702 = vmatpush1.xpose.msra.mxu0 %v432
    %703 = vmatprep.subr.mxu0 %v429
    %704 = vmatpush1.xpose.msra.mxu0 %v428
    %705 = vmatprep.subr.mxu0 %v425
    %706 = vmatpush1.xpose.msra.mxu0 %v424
    %707 = vmatprep.subr.mxu0 %v421
    %708 = vmatpush1.xpose.msra.mxu0 %v420
    %709 = vmatprep.subr.mxu0 0.0
    %710 = vmatpush2.xpose.msra.mxu0 0.0
    %711 = vmatprep.subr.mxu0 0.0
    %712 = vmatpush2.xpose.msra.mxu0 0.0
    %713 = vmatprep.subr.mxu0 0.0
    %714 = vmatpush2.xpose.msra.mxu0 0.0
    %715 = vmatprep.subr.mxu0 0.0
    %716 = vmatpush2.xpose.msra.mxu0 0.0
    %717 = vmatprep.subr.mxu0 0.0
    %718 = vmatpush2.xpose.msra.mxu0 0.0
    %719 = vmatprep.subr.mxu0 0.0
    %720 = vmatpush2.xpose.msra.mxu0 0.0
    %721 = vmatprep.subr.mxu0 0.0
    %722 = vmatpush2.xpose.msra.mxu0 0.0
    %723 = vmatprep.subr.mxu0 0.0
    %724 = vmatpush2.xpose.msra.mxu0 0.0
    %725 = vmatprep.subr.mxu0 0.0
    %726 = vmatpush2.xpose.msra.mxu0 0.0
    %727 = vmatprep.subr.mxu0 0.0
    %728 = vmatpush2.xpose.msra.mxu0 0.0
    %729 = vmatprep.subr.mxu0 0.0
    %730 = vmatpush2.xpose.msra.mxu0 0.0
    %731 = vmatprep.subr.mxu0 0.0
    %732 = vmatpush2.xpose.msra.mxu0 0.0
    %733 = vmatprep.subr.mxu0 0.0
    %734 = vmatpush2.xpose.msra.mxu0 0.0
    %735 = vmatprep.subr.mxu0 0.0
    %736 = vmatpush2.xpose.msra.mxu0 0.0
    %737 = vmatprep.subr.mxu0 0.0
    %738 = vmatpush2.xpose.msra.mxu0 0.0
    %739 = vmatprep.subr.mxu0 0.0
    %740 = vmatpush2.xpose.msra.mxu0 0.0
    %741 = vmatprep.mubr.f32.mxu0 %v213
    %742 = vmatmul.mubr.f32.gmra.mxu0 %v212
    %v743 = vpop.f32.mrf.mxu0
    %v744 = vadd.f32 %v599, %v743
    %v745 = vpop.f32.mrf.mxu0
    %746 = vmatprep.mubr.f32.mxu0 %v217
    %747 = vmatmul.mubr.f32.gmra.mxu0 %v216
    %v748 = vpop.f32.mrf.mxu0
    %v749 = vadd.f32 %v604, %v748
    %v750 = vpop.f32.mrf.mxu0
    %751 = vmatprep.mubr.f32.mxu0 %v221
    %752 = vmatmul.mubr.f32.gmra.mxu0 %v220
    %v753 = vpop.f32.mrf.mxu0
    %v754 = vadd.f32 %v609, %v753
    %v755 = vpop.f32.mrf.mxu0
    %756 = vmatprep.mubr.f32.mxu0 %v225
    %757 = vmatmul.mubr.f32.gmra.mxu0 %v224
    %v758 = vpop.f32.mrf.mxu0
    %v759 = vadd.f32 %v614, %v758
    %v760 = vpop.f32.mrf.mxu0
    %761 = vmatprep.mubr.f32.mxu0 %v229
    %762 = vmatmul.mubr.f32.gmra.mxu0 %v228
    %v763 = vpop.f32.mrf.mxu0
    %v764 = vadd.f32 %v619, %v763
    %v765 = vpop.f32.mrf.mxu0
    %766 = vmatprep.mubr.f32.mxu0 %v233
    %767 = vmatmul.mubr.f32.gmra.mxu0 %v232
    %v768 = vpop.f32.mrf.mxu0
    %v769 = vadd.f32 %v624, %v768
    %v770 = vpop.f32.mrf.mxu0
    %771 = vmatprep.mubr.f32.mxu0 %v237
    %772 = vmatmul.mubr.f32.gmra.mxu0 %v236
    %v773 = vpop.f32.mrf.mxu0
    %v774 = vadd.f32 %v629, %v773
    %v775 = vpop.f32.mrf.mxu0
    %776 = vmatprep.mubr.f32.mxu0 %v241
    %777 = vmatmul.mubr.f32.gmra.mxu0 %v240
    %v778 = vpop.f32.mrf.mxu0
    %v779 = vadd.f32 %v634, %v778
    %v780 = vpop.f32.mrf.mxu0
    %781 = vmatprep.mubr.f32.mxu0 %v245
    %782 = vmatmul.mubr.f32.gmra.mxu0 %v244
    %v783 = vpop.f32.mrf.mxu0
    %v784 = vadd.f32 %v639, %v783
    %v785 = vpop.f32.mrf.mxu0
    %786 = vmatprep.mubr.f32.mxu0 %v249
    %787 = vmatmul.mubr.f32.gmra.mxu0 %v248
    %v788 = vpop.f32.mrf.mxu0
    %v789 = vadd.f32 %v644, %v788
    %v790 = vpop.f32.mrf.mxu0
    %791 = vmatprep.mubr.f32.mxu0 %v253
    %792 = vmatmul.mubr.f32.gmra.mxu0 %v252
    %v793 = vpop.f32.mrf.mxu0
    %v794 = vadd.f32 %v649, %v793
    %v795 = vpop.f32.mrf.mxu0
    %796 = vmatprep.mubr.f32.mxu0 %v257
    %797 = vmatmul.mubr.f32.gmra.mxu0 %v256
    %v798 = vpop.f32.mrf.mxu0
    %v799 = vadd.f32 %v654, %v798
    %v800 = vpop.f32.mrf.mxu0
    %801 = vmatprep.mubr.f32.mxu0 %v261
    %802 = vmatmul.mubr.f32.gmra.mxu0 %v260
    %v803 = vpop.f32.mrf.mxu0
    %v804 = vadd.f32 %v659, %v803
    %v805 = vpop.f32.mrf.mxu0
    %806 = vmatprep.mubr.f32.mxu0 %v265
    %807 = vmatmul.mubr.f32.gmra.mxu0 %v264
    %v808 = vpop.f32.mrf.mxu0
    %v809 = vadd.f32 %v664, %v808
    %v810 = vpop.f32.mrf.mxu0
    %811 = vmatprep.mubr.f32.mxu0 %v269
    %812 = vmatmul.mubr.f32.gmra.mxu0 %v268
    %v813 = vpop.f32.mrf.mxu0
    %v814 = vadd.f32 %v669, %v813
    %v815 = vpop.f32.mrf.mxu0
    %816 = vmatprep.mubr.f32.mxu0 %v273
    %817 = vmatmul.mubr.f32.gmra.mxu0 %v272
    %v818 = vpop.f32.mrf.mxu0
    %v819 = vadd.f32 %v674, %v818
    %v820 = vpop.f32.mrf.mxu0
    %821 = vdwg.mxu0
    %822 = vmatprep.subr.mxu0 0.0
    %823 = vmatpush1.msra.mxu0 1.0
    %824 = vmatprep.subr.mxu0 0.0
    %825 = vmatpush1.msra.mxu0 1.0
    %826 = vmatprep.subr.mxu0 0.0
    %827 = vmatpush1.msra.mxu0 1.0
    %828 = vmatprep.subr.mxu0 0.0
    %829 = vmatpush1.msra.mxu0 1.0
    %830 = vmatprep.subr.mxu0 0.0
    %831 = vmatpush1.msra.mxu0 1.0
    %832 = vmatprep.subr.mxu0 0.0
    %833 = vmatpush1.msra.mxu0 1.0
    %834 = vmatprep.subr.mxu0 0.0
    %835 = vmatpush1.msra.mxu0 1.0
    %836 = vmatprep.subr.mxu0 0.0
    %837 = vmatpush1.msra.mxu0 1.0
    %838 = vmatprep.subr.mxu0 0.0
    %839 = vmatpush1.msra.mxu0 1.0
    %840 = vmatprep.subr.mxu0 0.0
    %841 = vmatpush1.msra.mxu0 1.0
    %842 = vmatprep.subr.mxu0 0.0
    %843 = vmatpush1.msra.mxu0 1.0
    %844 = vmatprep.subr.mxu0 0.0
    %845 = vmatpush1.msra.mxu0 1.0
    %846 = vmatprep.subr.mxu0 0.0
    %847 = vmatpush1.msra.mxu0 1.0
    %848 = vmatprep.subr.mxu0 0.0
    %849 = vmatpush1.msra.mxu0 1.0
    %850 = vmatprep.subr.mxu0 0.0
    %851 = vmatpush1.msra.mxu0 1.0
    %852 = vmatprep.subr.mxu0 0.0
    %853 = vmatpush1.msra.mxu0 1.0
    %854 = vmatprep.subr.mxu0 0.0
    %855 = vmatpush2.msra.mxu0 0.0
    %856 = vmatprep.subr.mxu0 0.0
    %857 = vmatpush2.msra.mxu0 0.0
    %858 = vmatprep.subr.mxu0 0.0
    %859 = vmatpush2.msra.mxu0 0.0
    %860 = vmatprep.subr.mxu0 0.0
    %861 = vmatpush2.msra.mxu0 0.0
    %862 = vmatprep.subr.mxu0 0.0
    %863 = vmatpush2.msra.mxu0 0.0
    %864 = vmatprep.subr.mxu0 0.0
    %865 = vmatpush2.msra.mxu0 0.0
    %866 = vmatprep.subr.mxu0 0.0
    %867 = vmatpush2.msra.mxu0 0.0
    %868 = vmatprep.subr.mxu0 0.0
    %869 = vmatpush2.msra.mxu0 0.0
    %870 = vmatprep.subr.mxu0 0.0
    %871 = vmatpush2.msra.mxu0 0.0
    %872 = vmatprep.subr.mxu0 0.0
    %873 = vmatpush2.msra.mxu0 0.0
    %874 = vmatprep.subr.mxu0 0.0
    %875 = vmatpush2.msra.mxu0 0.0
    %876 = vmatprep.subr.mxu0 0.0
    %877 = vmatpush2.msra.mxu0 0.0
    %878 = vmatprep.subr.mxu0 0.0
    %879 = vmatpush2.msra.mxu0 0.0
    %880 = vmatprep.subr.mxu0 0.0
    %881 = vmatpush2.msra.mxu0 0.0
    %882 = vmatprep.subr.mxu0 0.0
    %883 = vmatpush2.msra.mxu0 0.0
    %884 = vmatprep.subr.mxu0 0.0
    %885 = vmatpush2.msra.mxu0 0.0
    %886 = vmatprep.mubr.f32.mxu0 0.0
    %887 = vmatmul.mubr.f32.gmra.mxu0 %v744
    %v888 = vpop.f32.mrf.mxu0
    %v889 = vadd.f32 0.0, %v888
    %v890 = vpop.f32.mrf.mxu0
    %891 = vmatprep.mubr.f32.mxu0 0.0
    %892 = vmatmul.mubr.f32.gmra.mxu0 %v749
    %v893 = vpop.f32.mrf.mxu0
    %v894 = vadd.f32 0.0, %v893
    %v895 = vpop.f32.mrf.mxu0
    %896 = vmatprep.mubr.f32.mxu0 0.0
    %897 = vmatmul.mubr.f32.gmra.mxu0 %v754
    %v898 = vpop.f32.mrf.mxu0
    %v899 = vadd.f32 0.0, %v898
    %v900 = vpop.f32.mrf.mxu0
    %901 = vmatprep.mubr.f32.mxu0 0.0
    %902 = vmatmul.mubr.f32.gmra.mxu0 %v759
    %v903 = vpop.f32.mrf.mxu0
    %v904 = vadd.f32 0.0, %v903
    %v905 = vpop.f32.mrf.mxu0
    %906 = vmatprep.mubr.f32.mxu0 0.0
    %907 = vmatmul.mubr.f32.gmra.mxu0 %v764
    %v908 = vpop.f32.mrf.mxu0
    %v909 = vadd.f32 0.0, %v908
    %v910 = vpop.f32.mrf.mxu0
    %911 = vmatprep.mubr.f32.mxu0 0.0
    %912 = vmatmul.mubr.f32.gmra.mxu0 %v769
    %v913 = vpop.f32.mrf.mxu0
    %v914 = vadd.f32 0.0, %v913
    %v915 = vpop.f32.mrf.mxu0
    %916 = vmatprep.mubr.f32.mxu0 0.0
    %917 = vmatmul.mubr.f32.gmra.mxu0 %v774
    %v918 = vpop.f32.mrf.mxu0
    %v919 = vadd.f32 0.0, %v918
    %v920 = vpop.f32.mrf.mxu0
    %921 = vmatprep.mubr.f32.mxu0 0.0
    %922 = vmatmul.mubr.f32.gmra.mxu0 %v779
    %v923 = vpop.f32.mrf.mxu0
    %v924 = vadd.f32 0.0, %v923
    %v925 = vpop.f32.mrf.mxu0
    %926 = vmatprep.mubr.f32.mxu0 0.0
    %927 = vmatmul.mubr.f32.gmra.mxu0 %v784
    %v928 = vpop.f32.mrf.mxu0
    %v929 = vadd.f32 0.0, %v928
    %v930 = vpop.f32.mrf.mxu0
    %931 = vmatprep.mubr.f32.mxu0 0.0
    %932 = vmatmul.mubr.f32.gmra.mxu0 %v789
    %v933 = vpop.f32.mrf.mxu0
    %v934 = vadd.f32 0.0, %v933
    %v935 = vpop.f32.mrf.mxu0
    %936 = vmatprep.mubr.f32.mxu0 0.0
    %937 = vmatmul.mubr.f32.gmra.mxu0 %v794
    %v938 = vpop.f32.mrf.mxu0
    %v939 = vadd.f32 0.0, %v938
    %v940 = vpop.f32.mrf.mxu0
    %941 = vmatprep.mubr.f32.mxu0 0.0
    %942 = vmatmul.mubr.f32.gmra.mxu0 %v799
    %v943 = vpop.f32.mrf.mxu0
    %v944 = vadd.f32 0.0, %v943
    %v945 = vpop.f32.mrf.mxu0
    %946 = vmatprep.mubr.f32.mxu0 0.0
    %947 = vmatmul.mubr.f32.gmra.mxu0 %v804
    %v948 = vpop.f32.mrf.mxu0
    %v949 = vadd.f32 0.0, %v948
    %v950 = vpop.f32.mrf.mxu0
    %951 = vmatprep.mubr.f32.mxu0 0.0
    %952 = vmatmul.mubr.f32.gmra.mxu0 %v809
    %v953 = vpop.f32.mrf.mxu0
    %v954 = vadd.f32 0.0, %v953
    %v955 = vpop.f32.mrf.mxu0
    %956 = vmatprep.mubr.f32.mxu0 0.0
    %957 = vmatmul.mubr.f32.gmra.mxu0 %v814
    %v958 = vpop.f32.mrf.mxu0
    %v959 = vadd.f32 0.0, %v958
    %v960 = vpop.f32.mrf.mxu0
    %961 = vmatprep.mubr.f32.mxu0 0.0
    %962 = vmatmul.mubr.f32.gmra.mxu0 %v819
    %v963 = vpop.f32.mrf.mxu0
    %v964 = vadd.f32 0.0, %v963
    %v965 = vpop.f32.mrf.mxu0
    %966 = vdwg.mxu0
    %967 = vmatprep.subr.mxu0 0.0
    %968 = vmatpush1.xpose.msra.mxu0 %v819
    %969 = vmatprep.subr.mxu0 0.0
    %970 = vmatpush1.xpose.msra.mxu0 %v814
    %971 = vmatprep.subr.mxu0 0.0
    %972 = vmatpush1.xpose.msra.mxu0 %v809
    %973 = vmatprep.subr.mxu0 0.0
    %974 = vmatpush1.xpose.msra.mxu0 %v804
    %975 = vmatprep.subr.mxu0 0.0
    %976 = vmatpush1.xpose.msra.mxu0 %v799
    %977 = vmatprep.subr.mxu0 0.0
    %978 = vmatpush1.xpose.msra.mxu0 %v794
    %979 = vmatprep.subr.mxu0 0.0
    %980 = vmatpush1.xpose.msra.mxu0 %v789
    %981 = vmatprep.subr.mxu0 0.0
    %982 = vmatpush1.xpose.msra.mxu0 %v784
    %983 = vmatprep.subr.mxu0 0.0
    %984 = vmatpush1.xpose.msra.mxu0 %v779
    %985 = vmatprep.subr.mxu0 0.0
    %986 = vmatpush1.xpose.msra.mxu0 %v774
    %987 = vmatprep.subr.mxu0 0.0
    %988 = vmatpush1.xpose.msra.mxu0 %v769
    %989 = vmatprep.subr.mxu0 0.0
    %990 = vmatpush1.xpose.msra.mxu0 %v764
    %991 = vmatprep.subr.mxu0 0.0
    %992 = vmatpush1.xpose.msra.mxu0 %v759
    %993 = vmatprep.subr.mxu0 0.0
    %994 = vmatpush1.xpose.msra.mxu0 %v754
    %995 = vmatprep.subr.mxu0 0.0
    %996 = vmatpush1.xpose.msra.mxu0 %v749
    %997 = vmatprep.subr.mxu0 0.0
    %998 = vmatpush1.xpose.msra.mxu0 %v744
    %999 = vmatprep.subr.mxu0 0.0
    %1000 = vmatpush2.xpose.msra.mxu0 0.0
    %1001 = vmatprep.subr.mxu0 0.0
    %1002 = vmatpush2.xpose.msra.mxu0 0.0
    %1003 = vmatprep.subr.mxu0 0.0
    %1004 = vmatpush2.xpose.msra.mxu0 0.0
    %1005 = vmatprep.subr.mxu0 0.0
    %1006 = vmatpush2.xpose.msra.mxu0 0.0
    %1007 = vmatprep.subr.mxu0 0.0
    %1008 = vmatpush2.xpose.msra.mxu0 0.0
    %1009 = vmatprep.subr.mxu0 0.0
    %1010 = vmatpush2.xpose.msra.mxu0 0.0
    %1011 = vmatprep.subr.mxu0 0.0
    %1012 = vmatpush2.xpose.msra.mxu0 0.0
    %1013 = vmatprep.subr.mxu0 0.0
    %1014 = vmatpush2.xpose.msra.mxu0 0.0
    %1015 = vmatprep.subr.mxu0 0.0
    %1016 = vmatpush2.xpose.msra.mxu0 0.0
    %1017 = vmatprep.subr.mxu0 0.0
    %1018 = vmatpush2.xpose.msra.mxu0 0.0
    %1019 = vmatprep.subr.mxu0 0.0
    %1020 = vmatpush2.xpose.msra.mxu0 0.0
    %1021 = vmatprep.subr.mxu0 0.0
    %1022 = vmatpush2.xpose.msra.mxu0 0.0
    %1023 = vmatprep.subr.mxu0 0.0
    %1024 = vmatpush2.xpose.msra.mxu0 0.0
    %1025 = vmatprep.subr.mxu0 0.0
    %1026 = vmatpush2.xpose.msra.mxu0 0.0
    %1027 = vmatprep.subr.mxu0 0.0
    %1028 = vmatpush2.xpose.msra.mxu0 0.0
    %1029 = vmatprep.subr.mxu0 0.0
    %1030 = vmatpush2.xpose.msra.mxu0 0.0
    %1031 = vmatprep.mubr.f32.mxu0 0.0
    %1032 = vmatmul.mubr.f32.gmra.mxu0 1.0
    %v1033 = vpop.f32.mrf.mxu0
    %v1034 = vadd.f32 0.0, %v1033
    %v1035 = vpop.f32.mrf.mxu0
    %1036 = vdwg.mxu0
    %vm1037 = vcmp.gt.f32.partialorder %v889, 0.0
    %vm1038 = vcmp.gt.f32.partialorder %v894, 0.0
    %vm1039 = vcmp.gt.f32.partialorder %v899, 0.0
    %vm1040 = vcmp.gt.f32.partialorder %v904, 0.0
    %vm1041 = vcmp.gt.f32.partialorder %v909, 0.0
    %vm1042 = vcmp.gt.f32.partialorder %v914, 0.0
    %vm1043 = vcmp.gt.f32.partialorder %v919, 0.0
    %vm1044 = vcmp.gt.f32.partialorder %v924, 0.0
    %vm1045 = vcmp.gt.f32.partialorder %v929, 0.0
    %vm1046 = vcmp.gt.f32.partialorder %v934, 0.0
    %vm1047 = vcmp.gt.f32.partialorder %v939, 0.0
    %vm1048 = vcmp.gt.f32.partialorder %v944, 0.0
    %vm1049 = vcmp.gt.f32.partialorder %v949, 0.0
    %vm1050 = vcmp.gt.f32.partialorder %v954, 0.0
    %vm1051 = vcmp.gt.f32.partialorder %v959, 0.0
    %vm1052 = vcmp.gt.f32.partialorder %v964, 0.0
    %v1053 = vrsqrt.pop %v889
    %v1054 = vrsqrt.pop %v894
    %v1055 = vrsqrt.pop %v899
    %v1056 = vrsqrt.pop %v904
    %v1057 = vrsqrt.pop %v909
    %v1058 = vrsqrt.pop %v914
    %v1059 = vrsqrt.pop %v919
    %v1060 = vrsqrt.pop %v924
    %v1061 = vrsqrt.pop %v929
    %v1062 = vrsqrt.pop %v934
    %v1063 = vrsqrt.pop %v939
    %v1064 = vrsqrt.pop %v944
    %v1065 = vrsqrt.pop %v949
    %v1066 = vrsqrt.pop %v954
    %v1067 = vrsqrt.pop %v959
    %v1068 = vrsqrt.pop %v964
    %v1069 = vsel %vm1037, %v1053, 0.0
    %v1070 = vsel %vm1038, %v1054, 0.0
    %v1071 = vsel %vm1039, %v1055, 0.0
    %v1072 = vsel %vm1040, %v1056, 0.0
    %v1073 = vsel %vm1041, %v1057, 0.0
    %v1074 = vsel %vm1042, %v1058, 0.0
    %v1075 = vsel %vm1043, %v1059, 0.0
    %v1076 = vsel %vm1044, %v1060, 0.0
    %v1077 = vsel %vm1045, %v1061, 0.0
    %v1078 = vsel %vm1046, %v1062, 0.0
    %v1079 = vsel %vm1047, %v1063, 0.0
    %v1080 = vsel %vm1048, %v1064, 0.0
    %v1081 = vsel %vm1049, %v1065, 0.0
    %v1082 = vsel %vm1050, %v1066, 0.0
    %v1083 = vsel %vm1051, %v1067, 0.0
    %v1084 = vsel %vm1052, %v1068, 0.0
    %vm1085 = vcmp.gt.f32.partialorder %v1034, 0.0
    %v1086 = vrsqrt.pop %v1034
    %v1087 = vsel %vm1085, %v1086, 0.0
    %1089 = vset.pattern.permute.xlu0 0
    %1090 = vperm.xlu0 %1089, %v1069
    %v1091 = vpop.permute.xlu0 %1090
    %1094 = vset.pattern.permute.xlu0 0
    %1095 = vperm.xlu0 %1094, %v1070
    %v1096 = vpop.permute.xlu0 %1095
    %1099 = vset.pattern.permute.xlu0 0
    %1100 = vperm.xlu0 %1099, %v1071
    %v1101 = vpop.permute.xlu0 %1100
    %1104 = vset.pattern.permute.xlu0 0
    %1105 = vperm.xlu0 %1104, %v1072
    %v1106 = vpop.permute.xlu0 %1105
    %1109 = vset.pattern.permute.xlu0 0
    %1110 = vperm.xlu0 %1109, %v1073
    %v1111 = vpop.permute.xlu0 %1110
    %1114 = vset.pattern.permute.xlu0 0
    %1115 = vperm.xlu0 %1114, %v1074
    %v1116 = vpop.permute.xlu0 %1115
    %1119 = vset.pattern.permute.xlu0 0
    %1120 = vperm.xlu0 %1119, %v1075
    %v1121 = vpop.permute.xlu0 %1120
    %1124 = vset.pattern.permute.xlu0 0
    %1125 = vperm.xlu0 %1124, %v1076
    %v1126 = vpop.permute.xlu0 %1125
    %1129 = vset.pattern.permute.xlu0 0
    %1130 = vperm.xlu0 %1129, %v1077
    %v1131 = vpop.permute.xlu0 %1130
    %1134 = vset.pattern.permute.xlu0 0
    %1135 = vperm.xlu0 %1134, %v1078
    %v1136 = vpop.permute.xlu0 %1135
    %1139 = vset.pattern.permute.xlu0 0
    %1140 = vperm.xlu0 %1139, %v1079
    %v1141 = vpop.permute.xlu0 %1140
    %1144 = vset.pattern.permute.xlu0 0
    %1145 = vperm.xlu0 %1144, %v1080
    %v1146 = vpop.permute.xlu0 %1145
    %1149 = vset.pattern.permute.xlu0 0
    %1150 = vperm.xlu0 %1149, %v1081
    %v1151 = vpop.permute.xlu0 %1150
    %1154 = vset.pattern.permute.xlu0 0
    %1155 = vperm.xlu0 %1154, %v1082
    %v1156 = vpop.permute.xlu0 %1155
    %1159 = vset.pattern.permute.xlu0 0
    %1160 = vperm.xlu0 %1159, %v1083
    %v1161 = vpop.permute.xlu0 %1160
    %1164 = vset.pattern.permute.xlu0 0
    %1165 = vperm.xlu0 %1164, %v1084
    %v1166 = vpop.permute.xlu0 %1165
    %v1168 = vmul.f32 %v1091, %v744
    %v1169 = vmul.f32 %v1096, %v749
    %v1170 = vmul.f32 %v1101, %v754
    %v1171 = vmul.f32 %v1106, %v759
    %v1172 = vmul.f32 %v1111, %v764
    %v1173 = vmul.f32 %v1116, %v769
    %v1174 = vmul.f32 %v1121, %v774
    %v1175 = vmul.f32 %v1126, %v779
    %v1176 = vmul.f32 %v1131, %v784
    %v1177 = vmul.f32 %v1136, %v789
    %v1178 = vmul.f32 %v1141, %v794
    %v1179 = vmul.f32 %v1146, %v799
    %v1180 = vmul.f32 %v1151, %v804
    %v1181 = vmul.f32 %v1156, %v809
    %v1182 = vmul.f32 %v1161, %v814
    %v1183 = vmul.f32 %v1166, %v819
    %v1184 = vlaneseq
    %v1185 = vshrl.u32 %v1184, 7
    %v1186 = vsub.s32 0, %v1185
    %v1187 = vrot.slane %v1087, %v1186
    %v1188 = vmul.f32 %v1168, %v1187
    %v1189 = vmul.f32 %v1169, %v1187
    %v1190 = vmul.f32 %v1170, %v1187
    %v1191 = vmul.f32 %v1171, %v1187
    %v1192 = vmul.f32 %v1172, %v1187
    %v1193 = vmul.f32 %v1173, %v1187
    %v1194 = vmul.f32 %v1174, %v1187
    %v1195 = vmul.f32 %v1175, %v1187
    %v1196 = vmul.f32 %v1176, %v1187
    %v1197 = vmul.f32 %v1177, %v1187
    %v1198 = vmul.f32 %v1178, %v1187
    %v1199 = vmul.f32 %v1179, %v1187
    %v1200 = vmul.f32 %v1180, %v1187
    %v1201 = vmul.f32 %v1181, %v1187
    %v1202 = vmul.f32 %v1182, %v1187
    %v1203 = vmul.f32 %v1183, %v1187
    %v1204 = vld [vmem:[%s2] sm:$0xff]
    %v1205 = vld [vmem:[%s2 + $0x8] sm:$0xff]
    %v1206 = vld [vmem:[%s2 + $0x10] sm:$0xff]
    %v1207 = vld [vmem:[%s2 + $0x18] sm:$0xff]
    %v1208 = vld [vmem:[%s2 + $0x20] sm:$0xff]
    %v1209 = vld [vmem:[%s2 + $0x28] sm:$0xff]
    %v1210 = vld [vmem:[%s2 + $0x30] sm:$0xff]
    %v1211 = vld [vmem:[%s2 + $0x38] sm:$0xff]
    %v1212 = vld [vmem:[%s2 + $0x40] sm:$0xff]
    %v1213 = vld [vmem:[%s2 + $0x48] sm:$0xff]
    %v1214 = vld [vmem:[%s2 + $0x50] sm:$0xff]
    %v1215 = vld [vmem:[%s2 + $0x58] sm:$0xff]
    %v1216 = vld [vmem:[%s2 + $0x60] sm:$0xff]
    %v1217 = vld [vmem:[%s2 + $0x68] sm:$0xff]
    %v1218 = vld [vmem:[%s2 + $0x70] sm:$0xff]
    %v1219 = vld [vmem:[%s2 + $0x78] sm:$0xff]
    %v1220 = vld [vmem:[%s3] sm:$0xff]
    %v1221 = vld [vmem:[%s3 + $0x8] sm:$0xff]
    %v1222 = vld [vmem:[%s3 + $0x10] sm:$0xff]
    %v1223 = vld [vmem:[%s3 + $0x18] sm:$0xff]
    %v1224 = vld [vmem:[%s3 + $0x20] sm:$0xff]
    %v1225 = vld [vmem:[%s3 + $0x28] sm:$0xff]
    %v1226 = vld [vmem:[%s3 + $0x30] sm:$0xff]
    %v1227 = vld [vmem:[%s3 + $0x38] sm:$0xff]
    %v1228 = vld [vmem:[%s3 + $0x40] sm:$0xff]
    %v1229 = vld [vmem:[%s3 + $0x48] sm:$0xff]
    %v1230 = vld [vmem:[%s3 + $0x50] sm:$0xff]
    %v1231 = vld [vmem:[%s3 + $0x58] sm:$0xff]
    %v1232 = vld [vmem:[%s3 + $0x60] sm:$0xff]
    %v1233 = vld [vmem:[%s3 + $0x68] sm:$0xff]
    %v1234 = vld [vmem:[%s3 + $0x70] sm:$0xff]
    %v1235 = vld [vmem:[%s3 + $0x78] sm:$0xff]
    %1236 = vmatprep.subr.mxu0 0.0
    %1237 = vmatpush1.msra.mxu0 %v1235
    %1238 = vmatprep.subr.mxu0 0.0
    %1239 = vmatpush1.msra.mxu0 %v1234
    %1240 = vmatprep.subr.mxu0 0.0
    %1241 = vmatpush1.msra.mxu0 %v1233
    %1242 = vmatprep.subr.mxu0 0.0
    %1243 = vmatpush1.msra.mxu0 %v1232
    %1244 = vmatprep.subr.mxu0 0.0
    %1245 = vmatpush1.msra.mxu0 %v1231
    %1246 = vmatprep.subr.mxu0 0.0
    %1247 = vmatpush1.msra.mxu0 %v1230
    %1248 = vmatprep.subr.mxu0 0.0
    %1249 = vmatpush1.msra.mxu0 %v1229
    %1250 = vmatprep.subr.mxu0 0.0
    %1251 = vmatpush1.msra.mxu0 %v1228
    %1252 = vmatprep.subr.mxu0 0.0
    %1253 = vmatpush1.msra.mxu0 %v1227
    %1254 = vmatprep.subr.mxu0 0.0
    %1255 = vmatpush1.msra.mxu0 %v1226
    %1256 = vmatprep.subr.mxu0 0.0
    %1257 = vmatpush1.msra.mxu0 %v1225
    %1258 = vmatprep.subr.mxu0 0.0
    %1259 = vmatpush1.msra.mxu0 %v1224
    %1260 = vmatprep.subr.mxu0 0.0
    %1261 = vmatpush1.msra.mxu0 %v1223
    %1262 = vmatprep.subr.mxu0 0.0
    %1263 = vmatpush1.msra.mxu0 %v1222
    %1264 = vmatprep.subr.mxu0 0.0
    %1265 = vmatpush1.msra.mxu0 %v1221
    %1266 = vmatprep.subr.mxu0 0.0
    %1267 = vmatpush1.msra.mxu0 %v1220
    %1268 = vmatprep.subr.mxu0 0.0
    %1269 = vmatpush2.msra.mxu0 0.0
    %1270 = vmatprep.subr.mxu0 0.0
    %1271 = vmatpush2.msra.mxu0 0.0
    %1272 = vmatprep.subr.mxu0 0.0
    %1273 = vmatpush2.msra.mxu0 0.0
    %1274 = vmatprep.subr.mxu0 0.0
    %1275 = vmatpush2.msra.mxu0 0.0
    %1276 = vmatprep.subr.mxu0 0.0
    %1277 = vmatpush2.msra.mxu0 0.0
    %1278 = vmatprep.subr.mxu0 0.0
    %1279 = vmatpush2.msra.mxu0 0.0
    %1280 = vmatprep.subr.mxu0 0.0
    %1281 = vmatpush2.msra.mxu0 0.0
    %1282 = vmatprep.subr.mxu0 0.0
    %1283 = vmatpush2.msra.mxu0 0.0
    %1284 = vmatprep.subr.mxu0 0.0
    %1285 = vmatpush2.msra.mxu0 0.0
    %1286 = vmatprep.subr.mxu0 0.0
    %1287 = vmatpush2.msra.mxu0 0.0
    %1288 = vmatprep.subr.mxu0 0.0
    %1289 = vmatpush2.msra.mxu0 0.0
    %1290 = vmatprep.subr.mxu0 0.0
    %1291 = vmatpush2.msra.mxu0 0.0
    %1292 = vmatprep.subr.mxu0 0.0
    %1293 = vmatpush2.msra.mxu0 0.0
    %1294 = vmatprep.subr.mxu0 0.0
    %1295 = vmatpush2.msra.mxu0 0.0
    %1296 = vmatprep.subr.mxu0 0.0
    %1297 = vmatpush2.msra.mxu0 0.0
    %1298 = vmatprep.subr.mxu0 0.0
    %1299 = vmatpush2.msra.mxu0 0.0
    %1300 = vmatprep.mubr.f32.mxu0 0.0
    %1301 = vmatmul.mubr.f32.gmra.mxu0 %v1204
    %v1302 = vpop.f32.mrf.mxu0
    %v1303 = vadd.f32 0.0, %v1302
    %v1304 = vpop.f32.mrf.mxu0
    %1305 = vmatprep.mubr.f32.mxu0 0.0
    %1306 = vmatmul.mubr.f32.gmra.mxu0 %v1205
    %v1307 = vpop.f32.mrf.mxu0
    %v1308 = vadd.f32 0.0, %v1307
    %v1309 = vpop.f32.mrf.mxu0
    %1310 = vmatprep.mubr.f32.mxu0 0.0
    %1311 = vmatmul.mubr.f32.gmra.mxu0 %v1206
    %v1312 = vpop.f32.mrf.mxu0
    %v1313 = vadd.f32 0.0, %v1312
    %v1314 = vpop.f32.mrf.mxu0
    %1315 = vmatprep.mubr.f32.mxu0 0.0
    %1316 = vmatmul.mubr.f32.gmra.mxu0 %v1207
    %v1317 = vpop.f32.mrf.mxu0
    %v1318 = vadd.f32 0.0, %v1317
    %v1319 = vpop.f32.mrf.mxu0
    %1320 = vmatprep.mubr.f32.mxu0 0.0
    %1321 = vmatmul.mubr.f32.gmra.mxu0 %v1208
    %v1322 = vpop.f32.mrf.mxu0
    %v1323 = vadd.f32 0.0, %v1322
    %v1324 = vpop.f32.mrf.mxu0
    %1325 = vmatprep.mubr.f32.mxu0 0.0
    %1326 = vmatmul.mubr.f32.gmra.mxu0 %v1209
    %v1327 = vpop.f32.mrf.mxu0
    %v1328 = vadd.f32 0.0, %v1327
    %v1329 = vpop.f32.mrf.mxu0
    %1330 = vmatprep.mubr.f32.mxu0 0.0
    %1331 = vmatmul.mubr.f32.gmra.mxu0 %v1210
    %v1332 = vpop.f32.mrf.mxu0
    %v1333 = vadd.f32 0.0, %v1332
    %v1334 = vpop.f32.mrf.mxu0
    %1335 = vmatprep.mubr.f32.mxu0 0.0
    %1336 = vmatmul.mubr.f32.gmra.mxu0 %v1211
    %v1337 = vpop.f32.mrf.mxu0
    %v1338 = vadd.f32 0.0, %v1337
    %v1339 = vpop.f32.mrf.mxu0
    %1340 = vmatprep.mubr.f32.mxu0 0.0
    %1341 = vmatmul.mubr.f32.gmra.mxu0 %v1212
    %v1342 = vpop.f32.mrf.mxu0
    %v1343 = vadd.f32 0.0, %v1342
    %v1344 = vpop.f32.mrf.mxu0
    %1345 = vmatprep.mubr.f32.mxu0 0.0
    %1346 = vmatmul.mubr.f32.gmra.mxu0 %v1213
    %v1347 = vpop.f32.mrf.mxu0
    %v1348 = vadd.f32 0.0, %v1347
    %v1349 = vpop.f32.mrf.mxu0
    %1350 = vmatprep.mubr.f32.mxu0 0.0
    %1351 = vmatmul.mubr.f32.gmra.mxu0 %v1214
    %v1352 = vpop.f32.mrf.mxu0
    %v1353 = vadd.f32 0.0, %v1352
    %v1354 = vpop.f32.mrf.mxu0
    %1355 = vmatprep.mubr.f32.mxu0 0.0
    %1356 = vmatmul.mubr.f32.gmra.mxu0 %v1215
    %v1357 = vpop.f32.mrf.mxu0
    %v1358 = vadd.f32 0.0, %v1357
    %v1359 = vpop.f32.mrf.mxu0
    %1360 = vmatprep.mubr.f32.mxu0 0.0
    %1361 = vmatmul.mubr.f32.gmra.mxu0 %v1216
    %v1362 = vpop.f32.mrf.mxu0
    %v1363 = vadd.f32 0.0, %v1362
    %v1364 = vpop.f32.mrf.mxu0
    %1365 = vmatprep.mubr.f32.mxu0 0.0
    %1366 = vmatmul.mubr.f32.gmra.mxu0 %v1217
    %v1367 = vpop.f32.mrf.mxu0
    %v1368 = vadd.f32 0.0, %v1367
    %v1369 = vpop.f32.mrf.mxu0
    %1370 = vmatprep.mubr.f32.mxu0 0.0
    %1371 = vmatmul.mubr.f32.gmra.mxu0 %v1218
    %v1372 = vpop.f32.mrf.mxu0
    %v1373 = vadd.f32 0.0, %v1372
    %v1374 = vpop.f32.mrf.mxu0
    %1375 = vmatprep.mubr.f32.mxu0 0.0
    %1376 = vmatmul.mubr.f32.gmra.mxu0 %v1219
    %v1377 = vpop.f32.mrf.mxu0
    %v1378 = vadd.f32 0.0, %v1377
    %v1379 = vpop.f32.mrf.mxu0
    %1380 = vdwg.mxu0
    %v1381 = vld [vmem:[%s4] sm:$0x1]
    %v1383 = vlaneseq
    %v1384 = vshrl.u32 %v1383, 7
    %v1385 = vsub.s32 0, %v1384
    %v1386 = vrot.slane %v1381, %v1385
    %1388 = vmatprep.subr.mxu0 0.0
    %1389 = vmatpush1.msra.mxu0 %v1378
    %1390 = vmatprep.subr.mxu0 0.0
    %1391 = vmatpush1.msra.mxu0 %v1373
    %1392 = vmatprep.subr.mxu0 0.0
    %1393 = vmatpush1.msra.mxu0 %v1368
    %1394 = vmatprep.subr.mxu0 0.0
    %1395 = vmatpush1.msra.mxu0 %v1363
    %1396 = vmatprep.subr.mxu0 0.0
    %1397 = vmatpush1.msra.mxu0 %v1358
    %1398 = vmatprep.subr.mxu0 0.0
    %1399 = vmatpush1.msra.mxu0 %v1353
    %1400 = vmatprep.subr.mxu0 0.0
    %1401 = vmatpush1.msra.mxu0 %v1348
    %1402 = vmatprep.subr.mxu0 0.0
    %1403 = vmatpush1.msra.mxu0 %v1343
    %1404 = vmatprep.subr.mxu0 0.0
    %1405 = vmatpush1.msra.mxu0 %v1338
    %1406 = vmatprep.subr.mxu0 0.0
    %1407 = vmatpush1.msra.mxu0 %v1333
    %1408 = vmatprep.subr.mxu0 0.0
    %1409 = vmatpush1.msra.mxu0 %v1328
    %1410 = vmatprep.subr.mxu0 0.0
    %1411 = vmatpush1.msra.mxu0 %v1323
    %1412 = vmatprep.subr.mxu0 0.0
    %1413 = vmatpush1.msra.mxu0 %v1318
    %1414 = vmatprep.subr.mxu0 0.0
    %1415 = vmatpush1.msra.mxu0 %v1313
    %1416 = vmatprep.subr.mxu0 0.0
    %1417 = vmatpush1.msra.mxu0 %v1308
    %1418 = vmatprep.subr.mxu0 0.0
    %1419 = vmatpush1.msra.mxu0 %v1303
    %1420 = vmatprep.subr.mxu0 0.0
    %1421 = vmatpush2.msra.mxu0 0.0
    %1422 = vmatprep.subr.mxu0 0.0
    %1423 = vmatpush2.msra.mxu0 0.0
    %1424 = vmatprep.subr.mxu0 0.0
    %1425 = vmatpush2.msra.mxu0 0.0
    %1426 = vmatprep.subr.mxu0 0.0
    %1427 = vmatpush2.msra.mxu0 0.0
    %1428 = vmatprep.subr.mxu0 0.0
    %1429 = vmatpush2.msra.mxu0 0.0
    %1430 = vmatprep.subr.mxu0 0.0
    %1431 = vmatpush2.msra.mxu0 0.0
    %1432 = vmatprep.subr.mxu0 0.0
    %1433 = vmatpush2.msra.mxu0 0.0
    %1434 = vmatprep.subr.mxu0 0.0
    %1435 = vmatpush2.msra.mxu0 0.0
    %1436 = vmatprep.subr.mxu0 0.0
    %1437 = vmatpush2.msra.mxu0 0.0
    %1438 = vmatprep.subr.mxu0 0.0
    %1439 = vmatpush2.msra.mxu0 0.0
    %1440 = vmatprep.subr.mxu0 0.0
    %1441 = vmatpush2.msra.mxu0 0.0
    %1442 = vmatprep.subr.mxu0 0.0
    %1443 = vmatpush2.msra.mxu0 0.0
    %1444 = vmatprep.subr.mxu0 0.0
    %1445 = vmatpush2.msra.mxu0 0.0
    %1446 = vmatprep.subr.mxu0 0.0
    %1447 = vmatpush2.msra.mxu0 0.0
    %1448 = vmatprep.subr.mxu0 0.0
    %1449 = vmatpush2.msra.mxu0 0.0
    %1450 = vmatprep.subr.mxu0 0.0
    %1451 = vmatpush2.msra.mxu0 0.0
    %1452 = vmatprep.mubr.f32.mxu0 0.0
    %1453 = vmatmul.mubr.f32.gmra.mxu0 %v1188
    %v1454 = vpop.f32.mrf.mxu0
    %v1455 = vadd.f32 %v1386, %v1454
    %v1456 = vpop.f32.mrf.mxu0
    %1457 = vmatprep.mubr.f32.mxu0 0.0
    %1458 = vmatmul.mubr.f32.gmra.mxu0 %v1189
    %v1459 = vpop.f32.mrf.mxu0
    %v1460 = vadd.f32 %v1386, %v1459
    %v1461 = vpop.f32.mrf.mxu0
    %1462 = vmatprep.mubr.f32.mxu0 0.0
    %1463 = vmatmul.mubr.f32.gmra.mxu0 %v1190
    %v1464 = vpop.f32.mrf.mxu0
    %v1465 = vadd.f32 %v1386, %v1464
    %v1466 = vpop.f32.mrf.mxu0
    %1467 = vmatprep.mubr.f32.mxu0 0.0
    %1468 = vmatmul.mubr.f32.gmra.mxu0 %v1191
    %v1469 = vpop.f32.mrf.mxu0
    %v1470 = vadd.f32 %v1386, %v1469
    %v1471 = vpop.f32.mrf.mxu0
    %1472 = vmatprep.mubr.f32.mxu0 0.0
    %1473 = vmatmul.mubr.f32.gmra.mxu0 %v1192
    %v1474 = vpop.f32.mrf.mxu0
    %v1475 = vadd.f32 %v1386, %v1474
    %v1476 = vpop.f32.mrf.mxu0
    %1477 = vmatprep.mubr.f32.mxu0 0.0
    %1478 = vmatmul.mubr.f32.gmra.mxu0 %v1193
    %v1479 = vpop.f32.mrf.mxu0
    %v1480 = vadd.f32 %v1386, %v1479
    %v1481 = vpop.f32.mrf.mxu0
    %1482 = vmatprep.mubr.f32.mxu0 0.0
    %1483 = vmatmul.mubr.f32.gmra.mxu0 %v1194
    %v1484 = vpop.f32.mrf.mxu0
    %v1485 = vadd.f32 %v1386, %v1484
    %v1486 = vpop.f32.mrf.mxu0
    %1487 = vmatprep.mubr.f32.mxu0 0.0
    %1488 = vmatmul.mubr.f32.gmra.mxu0 %v1195
    %v1489 = vpop.f32.mrf.mxu0
    %v1490 = vadd.f32 %v1386, %v1489
    %v1491 = vpop.f32.mrf.mxu0
    %1492 = vmatprep.mubr.f32.mxu0 0.0
    %1493 = vmatmul.mubr.f32.gmra.mxu0 %v1196
    %v1494 = vpop.f32.mrf.mxu0
    %v1495 = vadd.f32 %v1386, %v1494
    %v1496 = vpop.f32.mrf.mxu0
    %1497 = vmatprep.mubr.f32.mxu0 0.0
    %1498 = vmatmul.mubr.f32.gmra.mxu0 %v1197
    %v1499 = vpop.f32.mrf.mxu0
    %v1500 = vadd.f32 %v1386, %v1499
    %v1501 = vpop.f32.mrf.mxu0
    %1502 = vmatprep.mubr.f32.mxu0 0.0
    %1503 = vmatmul.mubr.f32.gmra.mxu0 %v1198
    %v1504 = vpop.f32.mrf.mxu0
    %v1505 = vadd.f32 %v1386, %v1504
    %v1506 = vpop.f32.mrf.mxu0
    %1507 = vmatprep.mubr.f32.mxu0 0.0
    %1508 = vmatmul.mubr.f32.gmra.mxu0 %v1199
    %v1509 = vpop.f32.mrf.mxu0
    %v1510 = vadd.f32 %v1386, %v1509
    %v1511 = vpop.f32.mrf.mxu0
    %1512 = vmatprep.mubr.f32.mxu0 0.0
    %1513 = vmatmul.mubr.f32.gmra.mxu0 %v1200
    %v1514 = vpop.f32.mrf.mxu0
    %v1515 = vadd.f32 %v1386, %v1514
    %v1516 = vpop.f32.mrf.mxu0
    %1517 = vmatprep.mubr.f32.mxu0 0.0
    %1518 = vmatmul.mubr.f32.gmra.mxu0 %v1201
    %v1519 = vpop.f32.mrf.mxu0
    %v1520 = vadd.f32 %v1386, %v1519
    %v1521 = vpop.f32.mrf.mxu0
    %1522 = vmatprep.mubr.f32.mxu0 0.0
    %1523 = vmatmul.mubr.f32.gmra.mxu0 %v1202
    %v1524 = vpop.f32.mrf.mxu0
    %v1525 = vadd.f32 %v1386, %v1524
    %v1526 = vpop.f32.mrf.mxu0
    %1527 = vmatprep.mubr.f32.mxu0 0.0
    %1528 = vmatmul.mubr.f32.gmra.mxu0 %v1203
    %v1529 = vpop.f32.mrf.mxu0
    %v1530 = vadd.f32 %v1386, %v1529
    %v1531 = vpop.f32.mrf.mxu0
    %1532 = vdwg.mxu0
    %v1533 = vmax.f32 %v1455, 0.0
    %v1534 = vmax.f32 %v1460, 0.0
    %v1535 = vmax.f32 %v1465, 0.0
    %v1536 = vmax.f32 %v1470, 0.0
    %v1537 = vmax.f32 %v1475, 0.0
    %v1538 = vmax.f32 %v1480, 0.0
    %v1539 = vmax.f32 %v1485, 0.0
    %v1540 = vmax.f32 %v1490, 0.0
    %v1541 = vmax.f32 %v1495, 0.0
    %v1542 = vmax.f32 %v1500, 0.0
    %v1543 = vmax.f32 %v1505, 0.0
    %v1544 = vmax.f32 %v1510, 0.0
    %v1545 = vmax.f32 %v1515, 0.0
    %v1546 = vmax.f32 %v1520, 0.0
    %v1547 = vmax.f32 %v1525, 0.0
    %v1548 = vmax.f32 %v1530, 0.0
    %1549 = vst [vmem:[#allocation5] sm:$0xff] %v1533
    %1550 = vst [vmem:[#allocation5 + $0x8] sm:$0xff] %v1534
    %1551 = vst [vmem:[#allocation5 + $0x10] sm:$0xff] %v1535
    %1552 = vst [vmem:[#allocation5 + $0x18] sm:$0xff] %v1536
    %1553 = vst [vmem:[#allocation5 + $0x20] sm:$0xff] %v1537
    %1554 = vst [vmem:[#allocation5 + $0x28] sm:$0xff] %v1538
    %1555 = vst [vmem:[#allocation5 + $0x30] sm:$0xff] %v1539
    %1556 = vst [vmem:[#allocation5 + $0x38] sm:$0xff] %v1540
    %1557 = vst [vmem:[#allocation5 + $0x40] sm:$0xff] %v1541
    %1558 = vst [vmem:[#allocation5 + $0x48] sm:$0xff] %v1542
    %1559 = vst [vmem:[#allocation5 + $0x50] sm:$0xff] %v1543
    %1560 = vst [vmem:[#allocation5 + $0x58] sm:$0xff] %v1544
    %1561 = vst [vmem:[#allocation5 + $0x60] sm:$0xff] %v1545
    %1562 = vst [vmem:[#allocation5 + $0x68] sm:$0xff] %v1546
    %1563 = vst [vmem:[#allocation5 + $0x70] sm:$0xff] %v1547
    %1564 = vst [vmem:[#allocation5 + $0x78] sm:$0xff] %v1548
    %v1565 = vld [vmem:[%s5] sm:$0xff]
    %v1566 = vld [vmem:[%s5 + $0x8] sm:$0xff]
    %v1567 = vld [vmem:[%s5 + $0x10] sm:$0xff]
    %v1568 = vld [vmem:[%s5 + $0x18] sm:$0xff]
    %v1569 = vld [vmem:[%s5 + $0x20] sm:$0xff]
    %v1570 = vld [vmem:[%s5 + $0x28] sm:$0xff]
    %v1571 = vld [vmem:[%s5 + $0x30] sm:$0xff]
    %v1572 = vld [vmem:[%s5 + $0x38] sm:$0xff]
    %v1573 = vld [vmem:[%s5 + $0x40] sm:$0xff]
    %v1574 = vld [vmem:[%s5 + $0x48] sm:$0xff]
    %v1575 = vld [vmem:[%s5 + $0x50] sm:$0xff]
    %v1576 = vld [vmem:[%s5 + $0x58] sm:$0xff]
    %v1577 = vld [vmem:[%s5 + $0x60] sm:$0xff]
    %v1578 = vld [vmem:[%s5 + $0x68] sm:$0xff]
    %v1579 = vld [vmem:[%s5 + $0x70] sm:$0xff]
    %v1580 = vld [vmem:[%s5 + $0x78] sm:$0xff]
    %1581 = vmatprep.subr.mxu0 0.0
    %1582 = vmatpush1.msra.mxu0 %v1580
    %1583 = vmatprep.subr.mxu0 0.0
    %1584 = vmatpush1.msra.mxu0 %v1579
    %1585 = vmatprep.subr.mxu0 0.0
    %1586 = vmatpush1.msra.mxu0 %v1578
    %1587 = vmatprep.subr.mxu0 0.0
    %1588 = vmatpush1.msra.mxu0 %v1577
    %1589 = vmatprep.subr.mxu0 0.0
    %1590 = vmatpush1.msra.mxu0 %v1576
    %1591 = vmatprep.subr.mxu0 0.0
    %1592 = vmatpush1.msra.mxu0 %v1575
    %1593 = vmatprep.subr.mxu0 0.0
    %1594 = vmatpush1.msra.mxu0 %v1574
    %1595 = vmatprep.subr.mxu0 0.0
    %1596 = vmatpush1.msra.mxu0 %v1573
    %1597 = vmatprep.subr.mxu0 0.0
    %1598 = vmatpush1.msra.mxu0 %v1572
    %1599 = vmatprep.subr.mxu0 0.0
    %1600 = vmatpush1.msra.mxu0 %v1571
    %1601 = vmatprep.subr.mxu0 0.0
    %1602 = vmatpush1.msra.mxu0 %v1570
    %1603 = vmatprep.subr.mxu0 0.0
    %1604 = vmatpush1.msra.mxu0 %v1569
    %1605 = vmatprep.subr.mxu0 0.0
    %1606 = vmatpush1.msra.mxu0 %v1568
    %1607 = vmatprep.subr.mxu0 0.0
    %1608 = vmatpush1.msra.mxu0 %v1567
    %1609 = vmatprep.subr.mxu0 0.0
    %1610 = vmatpush1.msra.mxu0 %v1566
    %1611 = vmatprep.subr.mxu0 0.0
    %1612 = vmatpush1.msra.mxu0 %v1565
    %1613 = vmatprep.subr.mxu0 0.0
    %1614 = vmatpush2.msra.mxu0 0.0
    %1615 = vmatprep.subr.mxu0 0.0
    %1616 = vmatpush2.msra.mxu0 0.0
    %1617 = vmatprep.subr.mxu0 0.0
    %1618 = vmatpush2.msra.mxu0 0.0
    %1619 = vmatprep.subr.mxu0 0.0
    %1620 = vmatpush2.msra.mxu0 0.0
    %1621 = vmatprep.subr.mxu0 0.0
    %1622 = vmatpush2.msra.mxu0 0.0
    %1623 = vmatprep.subr.mxu0 0.0
    %1624 = vmatpush2.msra.mxu0 0.0
    %1625 = vmatprep.subr.mxu0 0.0
    %1626 = vmatpush2.msra.mxu0 0.0
    %1627 = vmatprep.subr.mxu0 0.0
    %1628 = vmatpush2.msra.mxu0 0.0
    %1629 = vmatprep.subr.mxu0 0.0
    %1630 = vmatpush2.msra.mxu0 0.0
    %1631 = vmatprep.subr.mxu0 0.0
    %1632 = vmatpush2.msra.mxu0 0.0
    %1633 = vmatprep.subr.mxu0 0.0
    %1634 = vmatpush2.msra.mxu0 0.0
    %1635 = vmatprep.subr.mxu0 0.0
    %1636 = vmatpush2.msra.mxu0 0.0
    %1637 = vmatprep.subr.mxu0 0.0
    %1638 = vmatpush2.msra.mxu0 0.0
    %1639 = vmatprep.subr.mxu0 0.0
    %1640 = vmatpush2.msra.mxu0 0.0
    %1641 = vmatprep.subr.mxu0 0.0
    %1642 = vmatpush2.msra.mxu0 0.0
    %1643 = vmatprep.subr.mxu0 0.0
    %1644 = vmatpush2.msra.mxu0 0.0
    %1645 = vmatprep.mubr.f32.mxu0 0.0
    %1646 = vmatmul.mubr.f32.gmra.mxu0 %v1533
    %v1647 = vpop.f32.mrf.mxu0
    %v1648 = vadd.f32 0.0, %v1647
    %v1649 = vpop.f32.mrf.mxu0
    %1650 = vmatprep.mubr.f32.mxu0 0.0
    %1651 = vmatmul.mubr.f32.gmra.mxu0 %v1534
    %v1652 = vpop.f32.mrf.mxu0
    %v1653 = vadd.f32 0.0, %v1652
    %v1654 = vpop.f32.mrf.mxu0
    %1655 = vmatprep.mubr.f32.mxu0 0.0
    %1656 = vmatmul.mubr.f32.gmra.mxu0 %v1535
    %v1657 = vpop.f32.mrf.mxu0
    %v1658 = vadd.f32 0.0, %v1657
    %v1659 = vpop.f32.mrf.mxu0
    %1660 = vmatprep.mubr.f32.mxu0 0.0
    %1661 = vmatmul.mubr.f32.gmra.mxu0 %v1536
    %v1662 = vpop.f32.mrf.mxu0
    %v1663 = vadd.f32 0.0, %v1662
    %v1664 = vpop.f32.mrf.mxu0
    %1665 = vmatprep.mubr.f32.mxu0 0.0
    %1666 = vmatmul.mubr.f32.gmra.mxu0 %v1537
    %v1667 = vpop.f32.mrf.mxu0
    %v1668 = vadd.f32 0.0, %v1667
    %v1669 = vpop.f32.mrf.mxu0
    %1670 = vmatprep.mubr.f32.mxu0 0.0
    %1671 = vmatmul.mubr.f32.gmra.mxu0 %v1538
    %v1672 = vpop.f32.mrf.mxu0
    %v1673 = vadd.f32 0.0, %v1672
    %v1674 = vpop.f32.mrf.mxu0
    %1675 = vmatprep.mubr.f32.mxu0 0.0
    %1676 = vmatmul.mubr.f32.gmra.mxu0 %v1539
    %v1677 = vpop.f32.mrf.mxu0
    %v1678 = vadd.f32 0.0, %v1677
    %v1679 = vpop.f32.mrf.mxu0
    %1680 = vmatprep.mubr.f32.mxu0 0.0
    %1681 = vmatmul.mubr.f32.gmra.mxu0 %v1540
    %v1682 = vpop.f32.mrf.mxu0
    %v1683 = vadd.f32 0.0, %v1682
    %v1684 = vpop.f32.mrf.mxu0
    %1685 = vmatprep.mubr.f32.mxu0 0.0
    %1686 = vmatmul.mubr.f32.gmra.mxu0 %v1541
    %v1687 = vpop.f32.mrf.mxu0
    %v1688 = vadd.f32 0.0, %v1687
    %v1689 = vpop.f32.mrf.mxu0
    %1690 = vmatprep.mubr.f32.mxu0 0.0
    %1691 = vmatmul.mubr.f32.gmra.mxu0 %v1542
    %v1692 = vpop.f32.mrf.mxu0
    %v1693 = vadd.f32 0.0, %v1692
    %v1694 = vpop.f32.mrf.mxu0
    %1695 = vmatprep.mubr.f32.mxu0 0.0
    %1696 = vmatmul.mubr.f32.gmra.mxu0 %v1543
    %v1697 = vpop.f32.mrf.mxu0
    %v1698 = vadd.f32 0.0, %v1697
    %v1699 = vpop.f32.mrf.mxu0
    %1700 = vmatprep.mubr.f32.mxu0 0.0
    %1701 = vmatmul.mubr.f32.gmra.mxu0 %v1544
    %v1702 = vpop.f32.mrf.mxu0
    %v1703 = vadd.f32 0.0, %v1702
    %v1704 = vpop.f32.mrf.mxu0
    %1705 = vmatprep.mubr.f32.mxu0 0.0
    %1706 = vmatmul.mubr.f32.gmra.mxu0 %v1545
    %v1707 = vpop.f32.mrf.mxu0
    %v1708 = vadd.f32 0.0, %v1707
    %v1709 = vpop.f32.mrf.mxu0
    %1710 = vmatprep.mubr.f32.mxu0 0.0
    %1711 = vmatmul.mubr.f32.gmra.mxu0 %v1546
    %v1712 = vpop.f32.mrf.mxu0
    %v1713 = vadd.f32 0.0, %v1712
    %v1714 = vpop.f32.mrf.mxu0
    %1715 = vmatprep.mubr.f32.mxu0 0.0
    %1716 = vmatmul.mubr.f32.gmra.mxu0 %v1547
    %v1717 = vpop.f32.mrf.mxu0
    %v1718 = vadd.f32 0.0, %v1717
    %v1719 = vpop.f32.mrf.mxu0
    %1720 = vmatprep.mubr.f32.mxu0 0.0
    %1721 = vmatmul.mubr.f32.gmra.mxu0 %v1548
    %v1722 = vpop.f32.mrf.mxu0
    %v1723 = vadd.f32 0.0, %v1722
    %v1724 = vpop.f32.mrf.mxu0
    %1725 = vdwg.mxu0
    %v1726 = vld [vmem:[%s6] sm:$0x1]
    %v1728 = vlaneseq
    %v1729 = vshrl.u32 %v1728, 7
    %v1730 = vsub.s32 0, %v1729
    %v1731 = vrot.slane %v1726, %v1730
    %1733 = vmatprep.subr.mxu0 0.0
    %1734 = vmatpush1.msra.mxu0 %v1723
    %1735 = vmatprep.subr.mxu0 0.0
    %1736 = vmatpush1.msra.mxu0 %v1718
    %1737 = vmatprep.subr.mxu0 0.0
    %1738 = vmatpush1.msra.mxu0 %v1713
    %1739 = vmatprep.subr.mxu0 0.0
    %1740 = vmatpush1.msra.mxu0 %v1708
    %1741 = vmatprep.subr.mxu0 0.0
    %1742 = vmatpush1.msra.mxu0 %v1703
    %1743 = vmatprep.subr.mxu0 0.0
    %1744 = vmatpush1.msra.mxu0 %v1698
    %1745 = vmatprep.subr.mxu0 0.0
    %1746 = vmatpush1.msra.mxu0 %v1693
    %1747 = vmatprep.subr.mxu0 0.0
    %1748 = vmatpush1.msra.mxu0 %v1688
    %1749 = vmatprep.subr.mxu0 0.0
    %1750 = vmatpush1.msra.mxu0 %v1683
    %1751 = vmatprep.subr.mxu0 0.0
    %1752 = vmatpush1.msra.mxu0 %v1678
    %1753 = vmatprep.subr.mxu0 0.0
    %1754 = vmatpush1.msra.mxu0 %v1673
    %1755 = vmatprep.subr.mxu0 0.0
    %1756 = vmatpush1.msra.mxu0 %v1668
    %1757 = vmatprep.subr.mxu0 0.0
    %1758 = vmatpush1.msra.mxu0 %v1663
    %1759 = vmatprep.subr.mxu0 0.0
    %1760 = vmatpush1.msra.mxu0 %v1658
    %1761 = vmatprep.subr.mxu0 0.0
    %1762 = vmatpush1.msra.mxu0 %v1653
    %1763 = vmatprep.subr.mxu0 0.0
    %1764 = vmatpush1.msra.mxu0 %v1648
    %1765 = vmatprep.subr.mxu0 0.0
    %1766 = vmatpush2.msra.mxu0 0.0
    %1767 = vmatprep.subr.mxu0 0.0
    %1768 = vmatpush2.msra.mxu0 0.0
    %1769 = vmatprep.subr.mxu0 0.0
    %1770 = vmatpush2.msra.mxu0 0.0
    %1771 = vmatprep.subr.mxu0 0.0
    %1772 = vmatpush2.msra.mxu0 0.0
    %1773 = vmatprep.subr.mxu0 0.0
    %1774 = vmatpush2.msra.mxu0 0.0
    %1775 = vmatprep.subr.mxu0 0.0
    %1776 = vmatpush2.msra.mxu0 0.0
    %1777 = vmatprep.subr.mxu0 0.0
    %1778 = vmatpush2.msra.mxu0 0.0
    %1779 = vmatprep.subr.mxu0 0.0
    %1780 = vmatpush2.msra.mxu0 0.0
    %1781 = vmatprep.subr.mxu0 0.0
    %1782 = vmatpush2.msra.mxu0 0.0
    %1783 = vmatprep.subr.mxu0 0.0
    %1784 = vmatpush2.msra.mxu0 0.0
    %1785 = vmatprep.subr.mxu0 0.0
    %1786 = vmatpush2.msra.mxu0 0.0
    %1787 = vmatprep.subr.mxu0 0.0
    %1788 = vmatpush2.msra.mxu0 0.0
    %1789 = vmatprep.subr.mxu0 0.0
    %1790 = vmatpush2.msra.mxu0 0.0
    %1791 = vmatprep.subr.mxu0 0.0
    %1792 = vmatpush2.msra.mxu0 0.0
    %1793 = vmatprep.subr.mxu0 0.0
    %1794 = vmatpush2.msra.mxu0 0.0
    %1795 = vmatprep.subr.mxu0 0.0
    %1796 = vmatpush2.msra.mxu0 0.0
    %1797 = vmatprep.mubr.f32.mxu0 0.0
    %1798 = vmatmul.mubr.f32.gmra.mxu0 %v1188
    %v1799 = vpop.f32.mrf.mxu0
    %v1800 = vadd.f32 %v1731, %v1799
    %v1801 = vpop.f32.mrf.mxu0
    %1802 = vmatprep.mubr.f32.mxu0 0.0
    %1803 = vmatmul.mubr.f32.gmra.mxu0 %v1189
    %v1804 = vpop.f32.mrf.mxu0
    %v1805 = vadd.f32 %v1731, %v1804
    %v1806 = vpop.f32.mrf.mxu0
    %1807 = vmatprep.mubr.f32.mxu0 0.0
    %1808 = vmatmul.mubr.f32.gmra.mxu0 %v1190
    %v1809 = vpop.f32.mrf.mxu0
    %v1810 = vadd.f32 %v1731, %v1809
    %v1811 = vpop.f32.mrf.mxu0
    %1812 = vmatprep.mubr.f32.mxu0 0.0
    %1813 = vmatmul.mubr.f32.gmra.mxu0 %v1191
    %v1814 = vpop.f32.mrf.mxu0
    %v1815 = vadd.f32 %v1731, %v1814
    %v1816 = vpop.f32.mrf.mxu0
    %1817 = vmatprep.mubr.f32.mxu0 0.0
    %1818 = vmatmul.mubr.f32.gmra.mxu0 %v1192
    %v1819 = vpop.f32.mrf.mxu0
    %v1820 = vadd.f32 %v1731, %v1819
    %v1821 = vpop.f32.mrf.mxu0
    %1822 = vmatprep.mubr.f32.mxu0 0.0
    %1823 = vmatmul.mubr.f32.gmra.mxu0 %v1193
    %v1824 = vpop.f32.mrf.mxu0
    %v1825 = vadd.f32 %v1731, %v1824
    %v1826 = vpop.f32.mrf.mxu0
    %1827 = vmatprep.mubr.f32.mxu0 0.0
    %1828 = vmatmul.mubr.f32.gmra.mxu0 %v1194
    %v1829 = vpop.f32.mrf.mxu0
    %v1830 = vadd.f32 %v1731, %v1829
    %v1831 = vpop.f32.mrf.mxu0
    %1832 = vmatprep.mubr.f32.mxu0 0.0
    %1833 = vmatmul.mubr.f32.gmra.mxu0 %v1195
    %v1834 = vpop.f32.mrf.mxu0
    %v1835 = vadd.f32 %v1731, %v1834
    %v1836 = vpop.f32.mrf.mxu0
    %1837 = vmatprep.mubr.f32.mxu0 0.0
    %1838 = vmatmul.mubr.f32.gmra.mxu0 %v1196
    %v1839 = vpop.f32.mrf.mxu0
    %v1840 = vadd.f32 %v1731, %v1839
    %v1841 = vpop.f32.mrf.mxu0
    %1842 = vmatprep.mubr.f32.mxu0 0.0
    %1843 = vmatmul.mubr.f32.gmra.mxu0 %v1197
    %v1844 = vpop.f32.mrf.mxu0
    %v1845 = vadd.f32 %v1731, %v1844
    %v1846 = vpop.f32.mrf.mxu0
    %1847 = vmatprep.mubr.f32.mxu0 0.0
    %1848 = vmatmul.mubr.f32.gmra.mxu0 %v1198
    %v1849 = vpop.f32.mrf.mxu0
    %v1850 = vadd.f32 %v1731, %v1849
    %v1851 = vpop.f32.mrf.mxu0
    %1852 = vmatprep.mubr.f32.mxu0 0.0
    %1853 = vmatmul.mubr.f32.gmra.mxu0 %v1199
    %v1854 = vpop.f32.mrf.mxu0
    %v1855 = vadd.f32 %v1731, %v1854
    %v1856 = vpop.f32.mrf.mxu0
    %1857 = vmatprep.mubr.f32.mxu0 0.0
    %1858 = vmatmul.mubr.f32.gmra.mxu0 %v1200
    %v1859 = vpop.f32.mrf.mxu0
    %v1860 = vadd.f32 %v1731, %v1859
    %v1861 = vpop.f32.mrf.mxu0
    %1862 = vmatprep.mubr.f32.mxu0 0.0
    %1863 = vmatmul.mubr.f32.gmra.mxu0 %v1201
    %v1864 = vpop.f32.mrf.mxu0
    %v1865 = vadd.f32 %v1731, %v1864
    %v1866 = vpop.f32.mrf.mxu0
    %1867 = vmatprep.mubr.f32.mxu0 0.0
    %1868 = vmatmul.mubr.f32.gmra.mxu0 %v1202
    %v1869 = vpop.f32.mrf.mxu0
    %v1870 = vadd.f32 %v1731, %v1869
    %v1871 = vpop.f32.mrf.mxu0
    %1872 = vmatprep.mubr.f32.mxu0 0.0
    %1873 = vmatmul.mubr.f32.gmra.mxu0 %v1203
    %v1874 = vpop.f32.mrf.mxu0
    %v1875 = vadd.f32 %v1731, %v1874
    %v1876 = vpop.f32.mrf.mxu0
    %1877 = vdwg.mxu0
    %vm1878 = vcmask 523264
    %1879 = vst.msk [vmem:[%s8] sm:$0xff] %vm1878, %v1800
    %1880 = vst.msk [vmem:[%s8 + $0x8] sm:$0xff] %vm1878, %v1805
    %1881 = vst.msk [vmem:[%s8 + $0x10] sm:$0xff] %vm1878, %v1810
    %1882 = vst.msk [vmem:[%s8 + $0x18] sm:$0xff] %vm1878, %v1815
    %1883 = vst.msk [vmem:[%s8 + $0x20] sm:$0xff] %vm1878, %v1820
    %1884 = vst.msk [vmem:[%s8 + $0x28] sm:$0xff] %vm1878, %v1825
    %1885 = vst.msk [vmem:[%s8 + $0x30] sm:$0xff] %vm1878, %v1830
    %1886 = vst.msk [vmem:[%s8 + $0x38] sm:$0xff] %vm1878, %v1835
    %1887 = vst.msk [vmem:[%s8 + $0x40] sm:$0xff] %vm1878, %v1840
    %1888 = vst.msk [vmem:[%s8 + $0x48] sm:$0xff] %vm1878, %v1845
    %1889 = vst.msk [vmem:[%s8 + $0x50] sm:$0xff] %vm1878, %v1850
    %1890 = vst.msk [vmem:[%s8 + $0x58] sm:$0xff] %vm1878, %v1855
    %1891 = vst.msk [vmem:[%s8 + $0x60] sm:$0xff] %vm1878, %v1860
    %1892 = vst.msk [vmem:[%s8 + $0x68] sm:$0xff] %vm1878, %v1865
    %1893 = vst.msk [vmem:[%s8 + $0x70] sm:$0xff] %vm1878, %v1870
    %1894 = vst.msk [vmem:[%s8 + $0x78] sm:$0xff] %vm1878, %v1875
    %v1896 = vsel %vm1878, %v1800, 0
    %v1899 = vsel %vm1878, %v1805, 0
    %v1902 = vsel %vm1878, %v1810, 0
    %v1905 = vsel %vm1878, %v1815, 0
    %v1908 = vsel %vm1878, %v1820, 0
    %v1911 = vsel %vm1878, %v1825, 0
    %v1914 = vsel %vm1878, %v1830, 0
    %v1917 = vsel %vm1878, %v1835, 0
    %v1920 = vsel %vm1878, %v1840, 0
    %v1923 = vsel %vm1878, %v1845, 0
    %v1926 = vsel %vm1878, %v1850, 0
    %v1929 = vsel %vm1878, %v1855, 0
    %v1932 = vsel %vm1878, %v1860, 0
    %v1935 = vsel %vm1878, %v1865, 0
    %v1938 = vsel %vm1878, %v1870, 0
    %v1941 = vsel %vm1878, %v1875, 0
    %1943 = vmatprep.subr.mxu0 0.0
    %1944 = vmatpush1.xpose.msra.mxu0 %v1941
    %1945 = vmatprep.subr.mxu0 0.0
    %1946 = vmatpush1.xpose.msra.mxu0 %v1938
    %1947 = vmatprep.subr.mxu0 0.0
    %1948 = vmatpush1.xpose.msra.mxu0 %v1935
    %1949 = vmatprep.subr.mxu0 0.0
    %1950 = vmatpush1.xpose.msra.mxu0 %v1932
    %1951 = vmatprep.subr.mxu0 0.0
    %1952 = vmatpush1.xpose.msra.mxu0 %v1929
    %1953 = vmatprep.subr.mxu0 0.0
    %1954 = vmatpush1.xpose.msra.mxu0 %v1926
    %1955 = vmatprep.subr.mxu0 0.0
    %1956 = vmatpush1.xpose.msra.mxu0 %v1923
    %1957 = vmatprep.subr.mxu0 0.0
    %1958 = vmatpush1.xpose.msra.mxu0 %v1920
    %1959 = vmatprep.subr.mxu0 0.0
    %1960 = vmatpush1.xpose.msra.mxu0 %v1917
    %1961 = vmatprep.subr.mxu0 0.0
    %1962 = vmatpush1.xpose.msra.mxu0 %v1914
    %1963 = vmatprep.subr.mxu0 0.0
    %1964 = vmatpush1.xpose.msra.mxu0 %v1911
    %1965 = vmatprep.subr.mxu0 0.0
    %1966 = vmatpush1.xpose.msra.mxu0 %v1908
    %1967 = vmatprep.subr.mxu0 0.0
    %1968 = vmatpush1.xpose.msra.mxu0 %v1905
    %1969 = vmatprep.subr.mxu0 0.0
    %1970 = vmatpush1.xpose.msra.mxu0 %v1902
    %1971 = vmatprep.subr.mxu0 0.0
    %1972 = vmatpush1.xpose.msra.mxu0 %v1899
    %1973 = vmatprep.subr.mxu0 0.0
    %1974 = vmatpush1.xpose.msra.mxu0 %v1896
    %1975 = vmatprep.subr.mxu0 0.0
    %1976 = vmatpush2.xpose.msra.mxu0 0.0
    %1977 = vmatprep.subr.mxu0 0.0
    %1978 = vmatpush2.xpose.msra.mxu0 0.0
    %1979 = vmatprep.subr.mxu0 0.0
    %1980 = vmatpush2.xpose.msra.mxu0 0.0
    %1981 = vmatprep.subr.mxu0 0.0
    %1982 = vmatpush2.xpose.msra.mxu0 0.0
    %1983 = vmatprep.subr.mxu0 0.0
    %1984 = vmatpush2.xpose.msra.mxu0 0.0
    %1985 = vmatprep.subr.mxu0 0.0
    %1986 = vmatpush2.xpose.msra.mxu0 0.0
    %1987 = vmatprep.subr.mxu0 0.0
    %1988 = vmatpush2.xpose.msra.mxu0 0.0
    %1989 = vmatprep.subr.mxu0 0.0
    %1990 = vmatpush2.xpose.msra.mxu0 0.0
    %1991 = vmatprep.subr.mxu0 0.0
    %1992 = vmatpush2.xpose.msra.mxu0 0.0
    %1993 = vmatprep.subr.mxu0 0.0
    %1994 = vmatpush2.xpose.msra.mxu0 0.0
    %1995 = vmatprep.subr.mxu0 0.0
    %1996 = vmatpush2.xpose.msra.mxu0 0.0
    %1997 = vmatprep.subr.mxu0 0.0
    %1998 = vmatpush2.xpose.msra.mxu0 0.0
    %1999 = vmatprep.subr.mxu0 0.0
    %2000 = vmatpush2.xpose.msra.mxu0 0.0
    %2001 = vmatprep.subr.mxu0 0.0
    %2002 = vmatpush2.xpose.msra.mxu0 0.0
    %2003 = vmatprep.subr.mxu0 0.0
    %2004 = vmatpush2.xpose.msra.mxu0 0.0
    %2005 = vmatprep.subr.mxu0 0.0
    %2006 = vmatpush2.xpose.msra.mxu0 0.0
    %2007 = vmatprep.mubr.f32.mxu0 0.0
    %2008 = vmatmul.mubr.f32.gmra.mxu0 %v1896
    %v2009 = vpop.f32.mrf.mxu0
    %v2010 = vadd.f32 0.0, %v2009
    %v2011 = vpop.f32.mrf.mxu0
    %2012 = vmatprep.mubr.f32.mxu0 0.0
    %2013 = vmatmul.mubr.f32.gmra.mxu0 %v1899
    %v2014 = vpop.f32.mrf.mxu0
    %v2015 = vadd.f32 0.0, %v2014
    %v2016 = vpop.f32.mrf.mxu0
    %2017 = vmatprep.mubr.f32.mxu0 0.0
    %2018 = vmatmul.mubr.f32.gmra.mxu0 %v1902
    %v2019 = vpop.f32.mrf.mxu0
    %v2020 = vadd.f32 0.0, %v2019
    %v2021 = vpop.f32.mrf.mxu0
    %2022 = vmatprep.mubr.f32.mxu0 0.0
    %2023 = vmatmul.mubr.f32.gmra.mxu0 %v1905
    %v2024 = vpop.f32.mrf.mxu0
    %v2025 = vadd.f32 0.0, %v2024
    %v2026 = vpop.f32.mrf.mxu0
    %2027 = vmatprep.mubr.f32.mxu0 0.0
    %2028 = vmatmul.mubr.f32.gmra.mxu0 %v1908
    %v2029 = vpop.f32.mrf.mxu0
    %v2030 = vadd.f32 0.0, %v2029
    %v2031 = vpop.f32.mrf.mxu0
    %2032 = vmatprep.mubr.f32.mxu0 0.0
    %2033 = vmatmul.mubr.f32.gmra.mxu0 %v1911
    %v2034 = vpop.f32.mrf.mxu0
    %v2035 = vadd.f32 0.0, %v2034
    %v2036 = vpop.f32.mrf.mxu0
    %2037 = vmatprep.mubr.f32.mxu0 0.0
    %2038 = vmatmul.mubr.f32.gmra.mxu0 %v1914
    %v2039 = vpop.f32.mrf.mxu0
    %v2040 = vadd.f32 0.0, %v2039
    %v2041 = vpop.f32.mrf.mxu0
    %2042 = vmatprep.mubr.f32.mxu0 0.0
    %2043 = vmatmul.mubr.f32.gmra.mxu0 %v1917
    %v2044 = vpop.f32.mrf.mxu0
    %v2045 = vadd.f32 0.0, %v2044
    %v2046 = vpop.f32.mrf.mxu0
    %2047 = vmatprep.mubr.f32.mxu0 0.0
    %2048 = vmatmul.mubr.f32.gmra.mxu0 %v1920
    %v2049 = vpop.f32.mrf.mxu0
    %v2050 = vadd.f32 0.0, %v2049
    %v2051 = vpop.f32.mrf.mxu0
    %2052 = vmatprep.mubr.f32.mxu0 0.0
    %2053 = vmatmul.mubr.f32.gmra.mxu0 %v1923
    %v2054 = vpop.f32.mrf.mxu0
    %v2055 = vadd.f32 0.0, %v2054
    %v2056 = vpop.f32.mrf.mxu0
    %2057 = vmatprep.mubr.f32.mxu0 0.0
    %2058 = vmatmul.mubr.f32.gmra.mxu0 %v1926
    %v2059 = vpop.f32.mrf.mxu0
    %v2060 = vadd.f32 0.0, %v2059
    %v2061 = vpop.f32.mrf.mxu0
    %2062 = vmatprep.mubr.f32.mxu0 0.0
    %2063 = vmatmul.mubr.f32.gmra.mxu0 %v1929
    %v2064 = vpop.f32.mrf.mxu0
    %v2065 = vadd.f32 0.0, %v2064
    %v2066 = vpop.f32.mrf.mxu0
    %2067 = vmatprep.mubr.f32.mxu0 0.0
    %2068 = vmatmul.mubr.f32.gmra.mxu0 %v1932
    %v2069 = vpop.f32.mrf.mxu0
    %v2070 = vadd.f32 0.0, %v2069
    %v2071 = vpop.f32.mrf.mxu0
    %2072 = vmatprep.mubr.f32.mxu0 0.0
    %2073 = vmatmul.mubr.f32.gmra.mxu0 %v1935
    %v2074 = vpop.f32.mrf.mxu0
    %v2075 = vadd.f32 0.0, %v2074
    %v2076 = vpop.f32.mrf.mxu0
    %2077 = vmatprep.mubr.f32.mxu0 0.0
    %2078 = vmatmul.mubr.f32.gmra.mxu0 %v1938
    %v2079 = vpop.f32.mrf.mxu0
    %v2080 = vadd.f32 0.0, %v2079
    %v2081 = vpop.f32.mrf.mxu0
    %2082 = vmatprep.mubr.f32.mxu0 0.0
    %2083 = vmatmul.mubr.f32.gmra.mxu0 %v1941
    %v2084 = vpop.f32.mrf.mxu0
    %v2085 = vadd.f32 0.0, %v2084
    %v2086 = vpop.f32.mrf.mxu0
    %2087 = vdwg.mxu0
    %2088 = vst [vmem:[#allocation6] sm:$0xff] %v2010
    %2089 = vst [vmem:[#allocation6 + $0x8] sm:$0xff] %v2015
    %2090 = vst [vmem:[#allocation6 + $0x10] sm:$0xff] %v2020
    %2091 = vst [vmem:[#allocation6 + $0x18] sm:$0xff] %v2025
    %2092 = vst [vmem:[#allocation6 + $0x20] sm:$0xff] %v2030
    %2093 = vst [vmem:[#allocation6 + $0x28] sm:$0xff] %v2035
    %2094 = vst [vmem:[#allocation6 + $0x30] sm:$0xff] %v2040
    %2095 = vst [vmem:[#allocation6 + $0x38] sm:$0xff] %v2045
    %2096 = vst [vmem:[#allocation6 + $0x40] sm:$0xff] %v2050
    %2097 = vst [vmem:[#allocation6 + $0x48] sm:$0xff] %v2055
    %2098 = vst [vmem:[#allocation6 + $0x50] sm:$0xff] %v2060
    %2099 = vst [vmem:[#allocation6 + $0x58] sm:$0xff] %v2065
    %2100 = vst [vmem:[#allocation6 + $0x60] sm:$0xff] %v2070
    %2101 = vst [vmem:[#allocation6 + $0x68] sm:$0xff] %v2075
    %2102 = vst [vmem:[#allocation6 + $0x70] sm:$0xff] %v2080
    %2103 = vst [vmem:[#allocation6 + $0x78] sm:$0xff] %v2085
    %v2104 = vld [vmem:[%s1] sm:$0xff]
    %v2105 = vld [vmem:[%s1 + $0x8] sm:$0xff]
    %v2106 = vld [vmem:[%s1 + $0x10] sm:$0xff]
    %v2107 = vld [vmem:[%s1 + $0x18] sm:$0xff]
    %v2108 = vld [vmem:[%s1 + $0x20] sm:$0xff]
    %v2109 = vld [vmem:[%s1 + $0x28] sm:$0xff]
    %v2110 = vld [vmem:[%s1 + $0x30] sm:$0xff]
    %v2111 = vld [vmem:[%s1 + $0x38] sm:$0xff]
    %2112 = vset.pattern.permute.xlu0 0
    %2113 = vperm.xlu0 %2112, %v2104
    %v2114 = vpop.permute.xlu0 %2113
    %2115 = vset.pattern.permute.xlu0 0
    %2116 = vperm.xlu0 %2115, %v2105
    %v2117 = vpop.permute.xlu0 %2116
    %2118 = vset.pattern.permute.xlu0 0
    %2119 = vperm.xlu0 %2118, %v2106
    %v2120 = vpop.permute.xlu0 %2119
    %2121 = vset.pattern.permute.xlu0 0
    %2122 = vperm.xlu0 %2121, %v2107
    %v2123 = vpop.permute.xlu0 %2122
    %2124 = vset.pattern.permute.xlu0 0
    %2125 = vperm.xlu0 %2124, %v2108
    %v2126 = vpop.permute.xlu0 %2125
    %2127 = vset.pattern.permute.xlu0 0
    %2128 = vperm.xlu0 %2127, %v2109
    %v2129 = vpop.permute.xlu0 %2128
    %2130 = vset.pattern.permute.xlu0 0
    %2131 = vperm.xlu0 %2130, %v2110
    %v2132 = vpop.permute.xlu0 %2131
    %2133 = vset.pattern.permute.xlu0 0
    %2134 = vperm.xlu0 %2133, %v2111
    %v2135 = vpop.permute.xlu0 %2134
    %vm2136 = vcmp.eq.s32.totalorder %v483, %v2114
    %vm2137 = vcmp.eq.s32.totalorder %v483, %v2117
    %vm2138 = vcmp.eq.s32.totalorder %v483, %v2120
    %vm2139 = vcmp.eq.s32.totalorder %v483, %v2123
    %vm2140 = vcmp.eq.s32.totalorder %v483, %v2126
    %vm2141 = vcmp.eq.s32.totalorder %v483, %v2129
    %vm2142 = vcmp.eq.s32.totalorder %v483, %v2132
    %vm2143 = vcmp.eq.s32.totalorder %v483, %v2135
    %v2144 = vsel %vm2136, 1, 0
    %v2145 = vsel %vm2137, 1, 0
    %v2146 = vsel %vm2138, 1, 0
    %v2147 = vsel %vm2139, 1, 0
    %v2148 = vsel %vm2140, 1, 0
    %v2149 = vsel %vm2141, 1, 0
    %v2150 = vsel %vm2142, 1, 0
    %v2151 = vsel %vm2143, 1, 0
    %v2152 = vcvt.s32.f32 %v2144
    %v2153 = vcvt.s32.f32 %v2145
    %v2154 = vcvt.s32.f32 %v2146
    %v2155 = vcvt.s32.f32 %v2147
    %v2156 = vcvt.s32.f32 %v2148
    %v2157 = vcvt.s32.f32 %v2149
    %v2158 = vcvt.s32.f32 %v2150
    %v2159 = vcvt.s32.f32 %v2151
    %2160 = vmatprep.subr.mxu0 0.0
    %2161 = vmatpush1.msra.mxu0 %v1875
    %2162 = vmatprep.subr.mxu0 0.0
    %2163 = vmatpush1.msra.mxu0 %v1870
    %2164 = vmatprep.subr.mxu0 0.0
    %2165 = vmatpush1.msra.mxu0 %v1865
    %2166 = vmatprep.subr.mxu0 0.0
    %2167 = vmatpush1.msra.mxu0 %v1860
    %2168 = vmatprep.subr.mxu0 0.0
    %2169 = vmatpush1.msra.mxu0 %v1855
    %2170 = vmatprep.subr.mxu0 0.0
    %2171 = vmatpush1.msra.mxu0 %v1850
    %2172 = vmatprep.subr.mxu0 0.0
    %2173 = vmatpush1.msra.mxu0 %v1845
    %2174 = vmatprep.subr.mxu0 0.0
    %2175 = vmatpush1.msra.mxu0 %v1840
    %2176 = vmatprep.subr.mxu0 0.0
    %2177 = vmatpush1.msra.mxu0 %v1835
    %2178 = vmatprep.subr.mxu0 0.0
    %2179 = vmatpush1.msra.mxu0 %v1830
    %2180 = vmatprep.subr.mxu0 0.0
    %2181 = vmatpush1.msra.mxu0 %v1825
    %2182 = vmatprep.subr.mxu0 0.0
    %2183 = vmatpush1.msra.mxu0 %v1820
    %2184 = vmatprep.subr.mxu0 0.0
    %2185 = vmatpush1.msra.mxu0 %v1815
    %2186 = vmatprep.subr.mxu0 0.0
    %2187 = vmatpush1.msra.mxu0 %v1810
    %2188 = vmatprep.subr.mxu0 0.0
    %2189 = vmatpush1.msra.mxu0 %v1805
    %2190 = vmatprep.subr.mxu0 0.0
    %2191 = vmatpush1.msra.mxu0 %v1800
    %2192 = vmatprep.subr.mxu0 0.0
    %2193 = vmatpush2.msra.mxu0 0.0
    %2194 = vmatprep.subr.mxu0 0.0
    %2195 = vmatpush2.msra.mxu0 0.0
    %2196 = vmatprep.subr.mxu0 0.0
    %2197 = vmatpush2.msra.mxu0 0.0
    %2198 = vmatprep.subr.mxu0 0.0
    %2199 = vmatpush2.msra.mxu0 0.0
    %2200 = vmatprep.subr.mxu0 0.0
    %2201 = vmatpush2.msra.mxu0 0.0
    %2202 = vmatprep.subr.mxu0 0.0
    %2203 = vmatpush2.msra.mxu0 0.0
    %2204 = vmatprep.subr.mxu0 0.0
    %2205 = vmatpush2.msra.mxu0 0.0
    %2206 = vmatprep.subr.mxu0 0.0
    %2207 = vmatpush2.msra.mxu0 0.0
    %2208 = vmatprep.subr.mxu0 0.0
    %2209 = vmatpush2.msra.mxu0 0.0
    %2210 = vmatprep.subr.mxu0 0.0
    %2211 = vmatpush2.msra.mxu0 0.0
    %2212 = vmatprep.subr.mxu0 0.0
    %2213 = vmatpush2.msra.mxu0 0.0
    %2214 = vmatprep.subr.mxu0 0.0
    %2215 = vmatpush2.msra.mxu0 0.0
    %2216 = vmatprep.subr.mxu0 0.0
    %2217 = vmatpush2.msra.mxu0 0.0
    %2218 = vmatprep.subr.mxu0 0.0
    %2219 = vmatpush2.msra.mxu0 0.0
    %2220 = vmatprep.subr.mxu0 0.0
    %2221 = vmatpush2.msra.mxu0 0.0
    %2222 = vmatprep.subr.mxu0 0.0
    %2223 = vmatpush2.msra.mxu0 0.0
    %2224 = vmatprep.mubr.f32.mxu0 0.0
    %2225 = vmatmul.mubr.f32.gmra.mxu0 %v2152
    %v2226 = vpop.f32.mrf.mxu0
    %v2227 = vadd.f32 0.0, %v2226
    %v2228 = vpop.f32.mrf.mxu0
    %2229 = vmatprep.mubr.f32.mxu0 0.0
    %2230 = vmatmul.mubr.f32.gmra.mxu0 %v2153
    %v2231 = vpop.f32.mrf.mxu0
    %v2232 = vadd.f32 0.0, %v2231
    %v2233 = vpop.f32.mrf.mxu0
    %2234 = vmatprep.mubr.f32.mxu0 0.0
    %2235 = vmatmul.mubr.f32.gmra.mxu0 %v2154
    %v2236 = vpop.f32.mrf.mxu0
    %v2237 = vadd.f32 0.0, %v2236
    %v2238 = vpop.f32.mrf.mxu0
    %2239 = vmatprep.mubr.f32.mxu0 0.0
    %2240 = vmatmul.mubr.f32.gmra.mxu0 %v2155
    %v2241 = vpop.f32.mrf.mxu0
    %v2242 = vadd.f32 0.0, %v2241
    %v2243 = vpop.f32.mrf.mxu0
    %2244 = vmatprep.mubr.f32.mxu0 0.0
    %2245 = vmatmul.mubr.f32.gmra.mxu0 %v2156
    %v2246 = vpop.f32.mrf.mxu0
    %v2247 = vadd.f32 0.0, %v2246
    %v2248 = vpop.f32.mrf.mxu0
    %2249 = vmatprep.mubr.f32.mxu0 0.0
    %2250 = vmatmul.mubr.f32.gmra.mxu0 %v2157
    %v2251 = vpop.f32.mrf.mxu0
    %v2252 = vadd.f32 0.0, %v2251
    %v2253 = vpop.f32.mrf.mxu0
    %2254 = vmatprep.mubr.f32.mxu0 0.0
    %2255 = vmatmul.mubr.f32.gmra.mxu0 %v2158
    %v2256 = vpop.f32.mrf.mxu0
    %v2257 = vadd.f32 0.0, %v2256
    %v2258 = vpop.f32.mrf.mxu0
    %2259 = vmatprep.mubr.f32.mxu0 0.0
    %2260 = vmatmul.mubr.f32.gmra.mxu0 %v2159
    %v2261 = vpop.f32.mrf.mxu0
    %v2262 = vadd.f32 0.0, %v2261
    %v2263 = vpop.f32.mrf.mxu0
    %2264 = vdwg.mxu0
    %v2265 = vmul.f32 %v2227, %v2247
    %v2266 = vmul.f32 %v2232, %v2252
    %v2267 = vmul.f32 %v2237, %v2257
    %v2268 = vmul.f32 %v2242, %v2262
    %2269 = vst.msk [vmem:[#allocation8] sm:$0xff] %vm1878, %v2265
    %2270 = vst.msk [vmem:[#allocation8 + $0x8] sm:$0xff] %vm1878, %v2266
    %2271 = vst.msk [vmem:[#allocation8 + $0x10] sm:$0xff] %vm1878, %v2267
    %2272 = vst.msk [vmem:[#allocation8 + $0x18] sm:$0xff] %vm1878, %v2268
    %v2274 = vsel %vm1878, 1.0, 0
    %v2277 = vsel %vm1878, %v2265, 0
    %v2280 = vsel %vm1878, %v2266, 0
    %v2283 = vsel %vm1878, %v2267, 0
    %v2286 = vsel %vm1878, %v2268, 0
    %2288 = vmatprep.subr.mxu0 0.0
    %2289 = vmatpush1.xpose.msra.mxu0 0.0
    %2290 = vmatprep.subr.mxu0 0.0
    %2291 = vmatpush1.xpose.msra.mxu0 0.0
    %2292 = vmatprep.subr.mxu0 0.0
    %2293 = vmatpush1.xpose.msra.mxu0 0.0
    %2294 = vmatprep.subr.mxu0 0.0
    %2295 = vmatpush1.xpose.msra.mxu0 0.0
    %2296 = vmatprep.subr.mxu0 0.0
    %2297 = vmatpush1.xpose.msra.mxu0 0.0
    %2298 = vmatprep.subr.mxu0 0.0
    %2299 = vmatpush1.xpose.msra.mxu0 0.0
    %2300 = vmatprep.subr.mxu0 0.0
    %2301 = vmatpush1.xpose.msra.mxu0 0.0
    %2302 = vmatprep.subr.mxu0 0.0
    %2303 = vmatpush1.xpose.msra.mxu0 0.0
    %2304 = vmatprep.subr.mxu0 0.0
    %2305 = vmatpush1.xpose.msra.mxu0 0.0
    %2306 = vmatprep.subr.mxu0 0.0
    %2307 = vmatpush1.xpose.msra.mxu0 0.0
    %2308 = vmatprep.subr.mxu0 0.0
    %2309 = vmatpush1.xpose.msra.mxu0 0.0
    %2310 = vmatprep.subr.mxu0 0.0
    %2311 = vmatpush1.xpose.msra.mxu0 0.0
    %2312 = vmatprep.subr.mxu0 0.0
    %2313 = vmatpush1.xpose.msra.mxu0 %v2286
    %2314 = vmatprep.subr.mxu0 0.0
    %2315 = vmatpush1.xpose.msra.mxu0 %v2283
    %2316 = vmatprep.subr.mxu0 0.0
    %2317 = vmatpush1.xpose.msra.mxu0 %v2280
    %2318 = vmatprep.subr.mxu0 0.0
    %2319 = vmatpush1.xpose.msra.mxu0 %v2277
    %2320 = vmatprep.subr.mxu0 0.0
    %2321 = vmatpush2.xpose.msra.mxu0 0.0
    %2322 = vmatprep.subr.mxu0 0.0
    %2323 = vmatpush2.xpose.msra.mxu0 0.0
    %2324 = vmatprep.subr.mxu0 0.0
    %2325 = vmatpush2.xpose.msra.mxu0 0.0
    %2326 = vmatprep.subr.mxu0 0.0
    %2327 = vmatpush2.xpose.msra.mxu0 0.0
    %2328 = vmatprep.subr.mxu0 0.0
    %2329 = vmatpush2.xpose.msra.mxu0 0.0
    %2330 = vmatprep.subr.mxu0 0.0
    %2331 = vmatpush2.xpose.msra.mxu0 0.0
    %2332 = vmatprep.subr.mxu0 0.0
    %2333 = vmatpush2.xpose.msra.mxu0 0.0
    %2334 = vmatprep.subr.mxu0 0.0
    %2335 = vmatpush2.xpose.msra.mxu0 0.0
    %2336 = vmatprep.subr.mxu0 0.0
    %2337 = vmatpush2.xpose.msra.mxu0 0.0
    %2338 = vmatprep.subr.mxu0 0.0
    %2339 = vmatpush2.xpose.msra.mxu0 0.0
    %2340 = vmatprep.subr.mxu0 0.0
    %2341 = vmatpush2.xpose.msra.mxu0 0.0
    %2342 = vmatprep.subr.mxu0 0.0
    %2343 = vmatpush2.xpose.msra.mxu0 0.0
    %2344 = vmatprep.subr.mxu0 0.0
    %2345 = vmatpush2.xpose.msra.mxu0 0.0
    %2346 = vmatprep.subr.mxu0 0.0
    %2347 = vmatpush2.xpose.msra.mxu0 0.0
    %2348 = vmatprep.subr.mxu0 0.0
    %2349 = vmatpush2.xpose.msra.mxu0 0.0
    %2350 = vmatprep.subr.mxu0 0.0
    %2351 = vmatpush2.xpose.msra.mxu0 0.0
    %2352 = vmatprep.mubr.f32.mxu0 0.0
    %2353 = vmatmul.mubr.f32.gmra.mxu0 %v2274
    %v2354 = vpop.f32.mrf.mxu0
    %v2355 = vadd.f32 0.0, %v2354
    %v2356 = vpop.f32.mrf.mxu0
    %2357 = vdwg.mxu0
    %vm2358 = vcmask 253952
    %2359 = vst.msk [vmem:[#allocation9] sm:$0x1] %vm2358, %v2355
    // Predicated region
    $region34: #{_net_core.1} parent=1 // pred_check
      _
    $region35: #{_net_core.1} parent=1 // pred_check_branch
      %2361 = sbr.rel (0) target = $region37
    $region36: #{_net_core.1} parent=1 // pred_region
      %s2363 = ssub.s32 2048, 2048
      %2364 = vsyncadd [#allocation4], %s2363
      %s2365 = sshll.u32 [#allocation5], 4
      %s2366 = int_to_ptr.vmem [resolvable:$true] %s2365
      %2371 = dma.vmem_to_hbm [thread:$0]  %s2366, 2048, %s7, [#allocation4], 128, 128, 8
    $region37: #{_net_core.1} parent=1 // pred_fallthru
      _
    // Predicated region
    $region38: #{_net_core.1} parent=1 // pred_check
      _
    $region39: #{_net_core.1} parent=1 // pred_check_branch
      %2373 = sbr.rel (0) target = $region41
    $region40: #{_net_core.1} parent=1 // pred_region
      _
    $region41: #{_net_core.1} parent=1 // pred_fallthru
      _
    // Predicated region
    $region42: #{_net_core.1} parent=1 // pred_check
      _
    $region43: #{_net_core.1} parent=1 // pred_check_branch
      %2375 = sbr.rel (0) target = $region45
    $region44: #{_net_core.1} parent=1 // pred_region
      %s2377 = ssub.s32 2048, 2048
      %2378 = vsyncadd [#allocation7], %s2377
      %s2379 = sshll.u32 [#allocation6], 4
      %s2380 = int_to_ptr.vmem [resolvable:$true] %s2379
      %2385 = dma.vmem_to_hbm [thread:$0]  %s2380, 2048, %s9, [#allocation7], 128, 128, 8
    $region45: #{_net_core.1} parent=1 // pred_fallthru
      _
    // Predicated region
    $region46: #{_net_core.1} parent=1 // pred_check
      _
    $region47: #{_net_core.1} parent=1 // pred_check_branch
      %2387 = sbr.rel (0) target = $region49
    $region48: #{_net_core.1} parent=1 // pred_region
      %s2389 = ssub.s32 512, 512
      %2390 = vsyncadd [#allocation7], %s2389
      %s2391 = sshll.u32 [#allocation8], 4
      %s2392 = int_to_ptr.vmem [resolvable:$true] %s2391
      %2397 = dma.vmem_to_hbm [thread:$0]  %s2392, 512, %s10, [#allocation7], 128, 128, 8
    $region49: #{_net_core.1} parent=1 // pred_fallthru
      _
    // Predicated region
    $region50: #{_net_core.1} parent=1 // pred_check
      _
    $region51: #{_net_core.1} parent=1 // pred_check_branch
      %2399 = sbr.rel (0) target = $region53
    $region52: #{_net_core.1} parent=1 // pred_region
      %s2401 = ssub.s32 16, 16
      %2402 = vsyncadd [#allocation10], %s2401
      %s2404 = sshll.u32 [#allocation9], 4
      %s2405 = int_to_ptr.vmem [resolvable:$true] %s2404
      %2407 = dma.vmem_to_hbm [thread:$0]  %s2405, 16, %s11, [#allocation10]
    $region53: #{_net_core.1} parent=1 // pred_fallthru
      _
    // Predicated region
    $region54: #{_net_core.1} parent=1 // pred_check
      _
    $region55: #{_net_core.1} parent=1 // pred_check_branch
      %2409 = sbr.rel (0) target = $region57
    $region56: #{_net_core.1} parent=1 // pred_region
      %2410 = dma.done [#allocation4], 2048
    $region57: #{_net_core.1} parent=1 // pred_fallthru
      _
    // Predicated region
    $region58: #{_net_core.1} parent=1 // pred_check
      _
    $region59: #{_net_core.1} parent=1 // pred_check_branch
      %2412 = sbr.rel (0) target = $region61
    $region60: #{_net_core.1} parent=1 // pred_region
      _
    $region61: #{_net_core.1} parent=1 // pred_fallthru
      _
    // Predicated region
    $region62: #{_net_core.1} parent=1 // pred_check
      _
    $region63: #{_net_core.1} parent=1 // pred_check_branch
      %2414 = sbr.rel (0) target = $region65
    $region64: #{_net_core.1} parent=1 // pred_region
      %2415 = dma.done [#allocation7], 2048
    $region65: #{_net_core.1} parent=1 // pred_fallthru
      _
    // Predicated region
    $region66: #{_net_core.1} parent=1 // pred_check
      _
    $region67: #{_net_core.1} parent=1 // pred_check_branch
      %2417 = sbr.rel (0) target = $region69
    $region68: #{_net_core.1} parent=1 // pred_region
      %2418 = dma.done [#allocation7], 512
    $region69: #{_net_core.1} parent=1 // pred_fallthru
      _
    // Predicated region
    $region70: #{_net_core.1} parent=1 // pred_check
      _
    $region71: #{_net_core.1} parent=1 // pred_check_branch
      %2420 = sbr.rel (0) target = $region73
    $region72: #{_net_core.1} parent=1 // pred_region
      %2421 = dma.done [#allocation10], 16
    $region73: #{_net_core.1} parent=1 // pred_fallthru
      _
    %2422 = vsyncpa [#allocation3], 1
    %2423 = vsyncpa [#allocation4], 1
    %2424 = vsyncpa [#allocation7], 1
    %2425 = vsyncpa [#allocation10], 1

</llo_original>
